<compile_context>
chip_gen: v6e
topology: v6e:2x2x1
jax: 0.10.0
libtpu: 0.0.40
codegen_flags: <defaults>
</compile_context>

<pallas_src>
import functools
import math
from math import pi as PI

import numpy as np
import jax
import jax.numpy as jnp
from jax import lax
from jax.experimental import pallas as pl
from jax.experimental.pallas import tpu as pltpu

SHIFT = float(np.log(2.0))  # ShiftedSoftplus shift


def _ssp(x):
    # numerically stable softplus(x) - log(2)
    return jnp.maximum(x, 0.0) + jnp.log(1.0 + jnp.exp(-jnp.abs(x))) - SHIFT


# --------------------------------------------------------------------------
# interaction layer kernel: grid = (target tiles [parallel], source tiles
# [arbitrary reduction]); acc_ref accumulates messages for the target tile.
# The source tile is processed in SC-node chunks to bound VMEM.
# --------------------------------------------------------------------------
def _interaction_kernel(eff_ref, flags_ref,
                        pos_t_ref, pos_ch_ref, gid_t_ref, gid_ch_ref,
                        v_t_ref, v_s_ref, mus_ref,
                        eW1_ref, eb1_ref, eW2_ref, eb2_ref, elin_ref,
                        vW1_ref, vb1_ref, vW2_ref, vb2_ref,
                        v_out_ref, acc_ref,
                        *, cutoff, rbf_scale, tm, ts, sc, elem_dtype):
    ti = pl.program_id(0)
    si = pl.program_id(1)
    n_s = pl.num_programs(1)
    n_chunks = ts // sc
    nf = acc_ref.shape[1]
    f32, bf16 = jnp.float32, jnp.bfloat16

    @pl.when(si == 0)
    def _():
        acc_ref[...] = jnp.zeros_like(acc_ref)

    # Compute only tiles whose target/source node tiles share a graph.  The
    # index_maps of the source operands repeat the previous block index when
    # flag==0, so skipped steps cost neither compute nor DMA.
    @pl.when(flags_ref[ti * n_s + si] > 0)
    def _():
        gid_t = gid_t_ref[...]                                    # [TM, 1] int32
        mus = mus_ref[...].reshape(1, 1, -1).astype(elem_dtype)   # [1, 1, Gp]
        row_i = ti * tm + lax.broadcasted_iota(jnp.int32, (tm, sc), 0)
        col_j = lax.broadcasted_iota(jnp.int32, (tm, sc), 1)

        def chunk_body(c, acc):
            loc = pl.multiple_of(c * sc, sc)        # source offset within tile
            off = si * ts + loc                     # global source node offset
            pos_c = pos_ch_ref[c]                   # [3, SC] f32 (nodes on lanes)
            gid_c = gid_ch_ref[c]                   # [1, SC] int32

            # ---- geometry: direct differences on the VPU (no cancellation)
            d2 = jnp.zeros((tm, sc), f32)
            for k in range(3):
                dk = pos_t_ref[:, k:k + 1] - pos_c[k:k + 1, :]
                d2 = d2 + dk * dk
            dist = jnp.sqrt(d2)                                   # [TM, SC]

            same = gid_t == gid_c                                 # graph-id compare
            # TODO(synk): radius_graph's max_num_neighbors=100 cap is not
            # enforced (dense mask assumes <=100 in-cutoff neighbours/atom).
            mask = jnp.logical_and(jnp.logical_and(same, dist < cutoff),
                                   row_i != off + col_j)
            cm = 0.5 * (jnp.cos(dist * (PI / cutoff)) + 1.0) * mask.astype(f32)

            # ---- RBF expansion with pre-scaled centres (one [TM,SC] broadcast)
            dsc = (dist * rbf_scale).astype(elem_dtype)[:, :, None]
            tdev = dsc - mus
            demb = jnp.exp(-(tdev * tdev))                        # [TM, SC, Gp]
            demb2 = demb.reshape(tm * sc, -1).astype(bf16)        # layout-preserving

            # ---- filter MLP (bf16 MXU, f32 accumulation)
            h = jnp.dot(demb2, eW1_ref[...],
                        preferred_element_type=f32) + eb1_ref[...]
            h = _ssp(h.astype(elem_dtype))
            W = jnp.dot(h.astype(bf16), eW2_ref[...],
                        preferred_element_type=f32) + eb2_ref[...]
            W = W.reshape(tm, sc, nf)                             # layout-preserving

            # ---- messages e[i,j,:] = v_lin[j,:] * W[i,j,:] * cm[i,j]
            v_lin = jnp.dot(v_s_ref[pl.ds(loc, sc), :].astype(bf16),
                            elin_ref[...], preferred_element_type=f32)  # [SC, F]
            msg = W * cm[:, :, None] * v_lin[None, :, :]
            return acc + jnp.sum(msg, axis=1)

        acc_ref[...] += lax.fori_loop(0, n_chunks, chunk_body,
                                      jnp.zeros((tm, nf), f32), unroll=True)

    # ---- update_v once all source tiles have been accumulated --------------
    @pl.when(si == n_s - 1)
    def _():
        # Padded rows (unique graph ids >= num_graphs) only receive the
        # bias-driven MLP update; they never exchange messages with any node
        # and their one-hot rows are zero, so they cannot leak into the readout.
        agg = acc_ref[...]
        o = jnp.dot(agg.astype(bf16), vW1_ref[...],
                    preferred_element_type=f32) + vb1_ref[...]
        o = _ssp(o.astype(elem_dtype))
        o = jnp.dot(o.astype(bf16), vW2_ref[...],
                    preferred_element_type=f32) + vb2_ref[...]
        v_out_ref[...] = v_t_ref[...] + o


# --------------------------------------------------------------------------
# readout kernel (update_u): grid over node tiles, per-graph sum on the MXU.
# (cheap vs. the interaction layers; a core-parallel split / fusion into the
# last interaction layer would help v7x but is not done here)
# --------------------------------------------------------------------------
def _readout_kernel(B_ref, v_ref, uW1_ref, ub1_ref, uW2_ref, ub2_ref,
                    u_ref, acc_ref):
    ti = pl.program_id(0)

    @pl.when(ti == 0)
    def _():
        acc_ref[...] = jnp.zeros_like(acc_ref)

    t = jnp.dot(v_ref[...].astype(jnp.bfloat16), uW1_ref[...],
                preferred_element_type=jnp.float32) + ub1_ref[...]
    t = _ssp(t)
    t = jnp.dot(t.astype(jnp.bfloat16), uW2_ref[...],
                preferred_element_type=jnp.float32) + ub2_ref[...]         # [TM, out]
    # per-graph scatter-sum as an MXU dot: u += B_tile^T @ t
    acc_ref[...] += lax.dot_general(B_ref[...], t, (((0,), (0,)), ((), ())),
                                    preferred_element_type=jnp.float32)

    @pl.when(ti == pl.num_programs(0) - 1)
    def _():
        u_ref[...] = acc_ref[...]


# --------------------------------------------------------------------------
# JAX wrapper: padding, tile-skip tables, per-layer pallas_calls, readout.
# --------------------------------------------------------------------------
def schnet_forward(z, pos, batch, params, *, cutoff, num_layers, num_graphs,
                   tile_t=128, tile_s=128, chunk_s=16, elem_dtype=jnp.float32):
    N = pos.shape[0]
    H = params["embed"].shape[1]
    Fc = params["elin"].shape[-1]
    G = params["offsets"].shape[0]
    H2 = params["uW1"].shape[-1]
    out_ch = params["uW2"].shape[-1]
    NG = num_graphs
    f32, bf16 = jnp.float32, jnp.bfloat16

    TM, TS = int(tile_t), int(tile_s)
    assert TM % 8 == 0 and TS % 8 == 0
    SC = math.gcd(TS, int(chunk_s))             # source chunk (multiple of 8)
    assert SC % 8 == 0 and TS % SC == 0
    lcm = (TM * TS) // math.gcd(TM, TS)
    NT = ((N + lcm - 1) // lcm) * lcm
    n_t, n_s = NT // TM, NT // TS
    NC = NT // SC

    Gp = ((G + 127) // 128) * 128               # lane-dense / MXU-friendly RBF dim
    delta = float(cutoff) / (G - 1)
    rbf_scale = math.sqrt(0.5) / delta          # exp(-(s(d-mu))^2) == exp(coeff(d-mu)^2)

    # padded atoms get unique graph ids >= num_graphs -> zero one-hot rows and
    # no message exchange with anything (including each other)
    pad_ids = num_graphs + jnp.arange(NT - N, dtype=jnp.int32)
    gid = jnp.concatenate([batch.astype(jnp.int32), pad_ids])
    pos_p = jnp.zeros((NT, 3), f32).at[:N].set(pos.astype(f32))
    B = jax.nn.one_hot(gid, NG, dtype=f32)                         # [NT, NG]
    v = jnp.zeros((NT, H), f32).at[:N].set(params["embed"][z])     # init_v gather (glue)

    gid_col = gid.reshape(NT, 1)                                   # target graph ids
    gid_src = gid.reshape(NC, 1, SC)                               # source ids, lane-major chunks
    pos_src = pos_p.reshape(NC, SC, 3).transpose(0, 2, 1)          # [NC, 3, SC]
    mus = jnp.zeros((1, Gp), f32).at[0, :G].set(params["offsets"] * rbf_scale)

    # per-(target tile, source tile) "shares a graph" flags + effective source
    # block table: skipped steps repeat the previous block index -> no DMA.
    present_t = (jnp.sum(B.reshape(n_t, TM, NG), axis=1) > 0).astype(f32)
    present_s = (jnp.sum(B.reshape(n_s, TS, NG), axis=1) > 0).astype(f32)
    flags = (present_t @ present_s.T > 0).astype(jnp.int32).reshape(-1)  # [n_t*n_s]
    step = jnp.arange(n_t * n_s, dtype=jnp.int32)
    si_of = step % n_s
    last_valid = lax.cummax(jnp.where(flags > 0, step, -1))
    eff = jnp.take(si_of, jnp.maximum(last_valid, 0)).astype(jnp.int32)

    # parameters: bf16 MXU operands, f32 biases; eW1 zero-padded to Gp
    eW1 = jnp.zeros((num_layers, Gp, Fc), f32).at[:, :G, :].set(params["eW1"]).astype(bf16)
    eW2 = params["eW2"].astype(bf16)
    elin = params["elin"].astype(bf16)
    vW1 = params["vW1"].astype(bf16)
    vW2 = params["vW2"].astype(bf16)
    uW1 = params["uW1"].astype(bf16)
    uW2 = params["uW2"].astype(bf16)

    kernel = functools.partial(_interaction_kernel, cutoff=float(cutoff),
                               rbf_scale=rbf_scale, tm=TM, ts=TS, sc=SC,
                               elem_dtype=elem_dtype)

    pairs = NT * NT
    layer_cost = pl.CostEstimate(
        flops=int(pairs * (2 * Gp * Fc + 2 * Fc * Fc + 3 * Fc + 16)
                  + n_t * NT * 2 * H * Fc + NT * (2 * Fc * H + 2 * H * H)),
        transcendentals=int(pairs * (Gp + Fc + 2) + NT * H),
        bytes_accessed=int(4 * (n_t * NT * H + NT * (3 + 1 + 2 * H))
                           + 2 * (Gp * Fc + Fc * Fc + H * Fc + Fc * H + H * H)),
    )

    tgt = lambda ti, si, eff, fl: (ti, 0)
    src = lambda ti, si, eff, fl: (eff[ti * n_s + si], 0)
    src3 = lambda ti, si, eff, fl: (eff[ti * n_s + si], 0, 0)
    cst = lambda ti, si, eff, fl: (0, 0)

    grid_spec = pltpu.PrefetchScalarGridSpec(
        num_scalar_prefetch=2,
        grid=(n_t, n_s),
        in_specs=[
            pl.BlockSpec((TM, 3), tgt),                 # pos (target tile)
            pl.BlockSpec((TS // SC, 3, SC), src3),      # pos (source, lane-major chunks)
            pl.BlockSpec((TM, 1), tgt),                 # graph id (target tile)
            pl.BlockSpec((TS // SC, 1, SC), src3),      # graph id (source chunks)
            pl.BlockSpec((TM, H), tgt),                 # v (target tile)
            pl.BlockSpec((TS, H), src),                 # v (source tile)
            pl.BlockSpec((1, Gp), cst),                 # scaled gaussian centres
            pl.BlockSpec((Gp, Fc), cst),                # eW1
            pl.BlockSpec((1, Fc), cst),                 # eb1
            pl.BlockSpec((Fc, Fc), cst),                # eW2
            pl.BlockSpec((1, Fc), cst),                 # eb2
            pl.BlockSpec((H, Fc), cst),                 # elin
            pl.BlockSpec((Fc, H), cst),                 # vW1
            pl.BlockSpec((1, H), cst),                  # vb1
            pl.BlockSpec((H, H), cst),                  # vW2
            pl.BlockSpec((1, H), cst),                  # vb2
        ],
        out_specs=pl.BlockSpec((TM, H), tgt),
        scratch_shapes=[pltpu.VMEM((TM, Fc), jnp.float32)],
    )

    layer_call = pl.pallas_call(
        kernel,
        out_shape=jax.ShapeDtypeStruct((NT, H), f32),
        grid_spec=grid_spec,
        compiler_params=pltpu.CompilerParams(
            dimension_semantics=("parallel", "arbitrary"),
            vmem_limit_bytes=40 * 1024 * 1024),
        cost_estimate=layer_cost,
    )

    for l in range(num_layers):
        v = layer_call(eff, flags, pos_p, pos_src, gid_col, gid_src, v, v, mus,
                       eW1[l], params["eb1"][l], eW2[l], params["eb2"][l],
                       elin[l], vW1[l], params["vb1"][l], vW2[l], params["vb2"][l])

    readout_cost = pl.CostEstimate(
        flops=int(NT * (2 * H * H2 + 2 * H2 * out_ch + 2 * NG * out_ch)),
        transcendentals=int(NT * H2),
        bytes_accessed=int(4 * NT * (H + NG) + 2 * (H * H2 + H2 * out_ch)),
    )

    u = pl.pallas_call(
        _readout_kernel,
        out_shape=jax.ShapeDtypeStruct((NG, out_ch), f32),
        grid=(n_t,),
        in_specs=[
            pl.BlockSpec((TM, NG), lambda ti: (ti, 0)),
            pl.BlockSpec((TM, H), lambda ti: (ti, 0)),
            pl.BlockSpec((H, H2), lambda ti: (0, 0)),
            pl.BlockSpec((1, H2), lambda ti: (0, 0)),
            pl.BlockSpec((H2, out_ch), lambda ti: (0, 0)),
            pl.BlockSpec((1, out_ch), lambda ti: (0, 0)),
        ],
        out_specs=pl.BlockSpec((NG, out_ch), lambda ti: (0, 0)),
        scratch_shapes=[pltpu.VMEM((NG, out_ch), jnp.float32)],
        compiler_params=pltpu.CompilerParams(dimension_semantics=("arbitrary",)),
        cost_estimate=readout_cost,
    )(B, v, uW1, params["ub1"], uW2, params["ub2"])
    return u


# --------------------------------------------------------------------------
# pure-JAX reference (dense radius_graph semantics) for validation
# --------------------------------------------------------------------------
def schnet_reference(z, pos, batch, params, *, cutoff, num_layers, num_graphs,
                     matmul_dtype=jnp.float32):
    md = matmul_dtype

    def mm(a, b):
        return jnp.dot(a.astype(md), b.astype(md),
                       preferred_element_type=jnp.float32)

    v = params["embed"][z].astype(jnp.float32)
    B = jax.nn.one_hot(batch, num_graphs, dtype=jnp.float32)
    offsets = params["offsets"].reshape(1, -1)
    G = offsets.shape[-1]
    delta = float(cutoff) / (G - 1)
    coeff = -0.5 / delta ** 2
    N = pos.shape[0]

    diff = pos[:, None, :] - pos[None, :, :]
    dist = jnp.sqrt(jnp.sum(diff * diff, axis=-1))
    same = (B @ B.T) > 0.5
    idx = jnp.arange(N)
    mask = same & (dist < cutoff) & (idx[:, None] != idx[None, :])
    maskf = mask.astype(jnp.float32)

    dist_flat = dist.reshape(N * N, 1)
    dist_emb = jnp.exp(coeff * (dist_flat - offsets) ** 2)
    C = 0.5 * (jnp.cos(dist_flat * (PI / cutoff)) + 1.0)

    for l in range(num_layers):
        h = _ssp(mm(dist_emb, params["eW1"][l]) + params["eb1"][l])
        W = (mm(h, params["eW2"][l]) + params["eb2"][l]) * C
        v_lin = mm(v, params["elin"][l])
        Wm = W.reshape(N, N, -1) * maskf[:, :, None]
        agg = jnp.sum(Wm * v_lin[None, :, :], axis=1)
        o = mm(_ssp(mm(agg, params["vW1"][l]) + params["vb1"][l]),
               params["vW2"][l]) + params["vb2"][l]
        v = v + o

    t = mm(_ssp(mm(v, params["uW1"]) + params["ub1"]), params["uW2"]) + params["ub2"]
    return B.T @ t


def init_params(key, *, num_layers, hidden, filters, gaussians, out_ch, cutoff):
    def xavier(k, shape):
        fan_in, fan_out = shape[-2], shape[-1]
        lim = (6.0 / (fan_in + fan_out)) ** 0.5
        return jax.random.uniform(k, shape, jnp.float32, -lim, lim)

    ks = jax.random.split(key, 10)
    return {
        "embed": jax.random.normal(ks[0], (100, hidden), jnp.float32),
        "offsets": jnp.linspace(0.0, cutoff, gaussians, dtype=jnp.float32),
        # update_e (stacked over layers); weights stored (in, out) for x @ W
        "eW1": xavier(ks[1], (num_layers, gaussians, filters)),
        "eb1": jnp.zeros((num_layers, 1, filters), jnp.float32),
        "eW2": xavier(ks[2], (num_layers, filters, filters)),
        "eb2": 0.01 * jax.random.normal(ks[3], (num_layers, 1, filters), jnp.float32),
        "elin": xavier(ks[4], (num_layers, hidden, filters)),
        # update_v
        "vW1": xavier(ks[5], (num_layers, filters, hidden)),
        "vb1": jnp.zeros((num_layers, 1, hidden), jnp.float32),
        "vW2": xavier(ks[6], (num_layers, hidden, hidden)),
        "vb2": jnp.zeros((num_layers, 1, hidden), jnp.float32),
        # update_u
        "uW1": xavier(ks[7], (hidden, hidden // 2)),
        "ub1": jnp.zeros((1, hidden // 2), jnp.float32),
        "uW2": xavier(ks[8], (hidden // 2, out_ch)),
        "ub2": jnp.zeros((1, out_ch), jnp.float32),
    }


if __name__ == "__main__":
    cutoff = 5.0
    num_layers = 2
    hidden_channels = 32
    num_filters = 32
    num_gaussians = 50
    out_channels = 4

    # uneven graphs so padding, tile skipping and the eff-block table are exercised
    num_graphs = 2
    graph_sizes = (8, 6)
    N = sum(graph_sizes)

    key = jax.random.PRNGKey(0)
    k_pos, k_z, k_par = jax.random.split(key, 3)

    pos = jax.random.uniform(k_pos, (N, 3), jnp.float32) * 4.0   # some pairs exceed cutoff
    z = jax.random.randint(k_z, (N,), 0, 100)
    batch = jnp.concatenate([jnp.full((graph_sizes[0],), 0, jnp.int32),
                             jnp.full((graph_sizes[1],), 1, jnp.int32)])

    params = init_params(k_par, num_layers=num_layers, hidden=hidden_channels,
                         filters=num_filters, gaussians=num_gaussians,
                         out_ch=out_channels, cutoff=cutoff)

    # small tiles so the (target x source) grid, accumulator, chunk loop and
    # tile-skip paths are all exercised at toy N (production: 128 x 128, SC=16)
    u = schnet_forward(z, pos, batch, params, cutoff=cutoff,
                       num_layers=num_layers, num_graphs=num_graphs,
                       tile_t=8, tile_s=8, chunk_s=16)
    u = jax.block_until_ready(u)

    # bf16-matmul-matched reference (same math as the kernel, f32 accumulation)
    u_ref = schnet_reference(z, pos, batch, params, cutoff=cutoff,
                             num_layers=num_layers, num_graphs=num_graphs,
                             matmul_dtype=jnp.bfloat16)
    np.testing.assert_allclose(np.asarray(u), np.asarray(u_ref),
                               rtol=2e-2, atol=2e-2)

    print("KERNEL_OK")
</pallas_src>

<mosaic_0001>
module attributes {stable_mosaic.version = 11 : i64} {
  func.func @_interaction_kernel(%arg0: i32, %arg1: i32, %arg2: memref<4xi32, #tpu.memory_space<smem>>, %arg3: memref<4xi32, #tpu.memory_space<smem>>, %arg4: memref<8x3xf32, #tpu.memory_space<vmem>>, %arg5: memref<1x3x8xf32, #tpu.memory_space<vmem>>, %arg6: memref<8x1xi32, #tpu.memory_space<vmem>>, %arg7: memref<1x1x8xi32, #tpu.memory_space<vmem>>, %arg8: memref<8x32xf32, #tpu.memory_space<vmem>>, %arg9: memref<8x32xf32, #tpu.memory_space<vmem>>, %arg10: memref<1x128xf32, #tpu.memory_space<vmem>>, %arg11: memref<128x32xbf16, #tpu.memory_space<vmem>>, %arg12: memref<1x32xf32, #tpu.memory_space<vmem>>, %arg13: memref<32x32xbf16, #tpu.memory_space<vmem>>, %arg14: memref<1x32xf32, #tpu.memory_space<vmem>>, %arg15: memref<32x32xbf16, #tpu.memory_space<vmem>>, %arg16: memref<32x32xbf16, #tpu.memory_space<vmem>>, %arg17: memref<1x32xf32, #tpu.memory_space<vmem>>, %arg18: memref<32x32xbf16, #tpu.memory_space<vmem>>, %arg19: memref<1x32xf32, #tpu.memory_space<vmem>>, %arg20: memref<8x32xf32, #tpu.memory_space<vmem>>, %arg21: memref<8x32xf32, #tpu.memory_space<vmem>>) attributes {dimension_semantics = [#tpu.dimension_semantics<parallel>, #tpu.dimension_semantics<arbitrary>], iteration_bounds = array<i64: 2, 2>, scalar_prefetch = 2 : i64, scratch_operands = 1 : i64, tpu.core_type = #tpu.core_type<tc>, window_params = [{transform_indices = @transform_0, window_bounds = array<i64: 8, 3>}, {transform_indices = @transform_1, window_bounds = array<i64: 1, 3, 8>}, {transform_indices = @transform_2, window_bounds = array<i64: 8, 1>}, {transform_indices = @transform_3, window_bounds = array<i64: 1, 1, 8>}, {transform_indices = @transform_4, window_bounds = array<i64: 8, 32>}, {transform_indices = @transform_5, window_bounds = array<i64: 8, 32>}, {pipeline_mode = #tpu.pipeline_mode<synchronous>, transform_indices = @transform_6, window_bounds = array<i64: 1, 128>}, {pipeline_mode = #tpu.pipeline_mode<synchronous>, transform_indices = @transform_7, window_bounds = array<i64: 128, 32>}, {pipeline_mode = #tpu.pipeline_mode<synchronous>, transform_indices = @transform_8, window_bounds = array<i64: 1, 32>}, {pipeline_mode = #tpu.pipeline_mode<synchronous>, transform_indices = @transform_9, window_bounds = array<i64: 32, 32>}, {pipeline_mode = #tpu.pipeline_mode<synchronous>, transform_indices = @transform_10, window_bounds = array<i64: 1, 32>}, {pipeline_mode = #tpu.pipeline_mode<synchronous>, transform_indices = @transform_11, window_bounds = array<i64: 32, 32>}, {pipeline_mode = #tpu.pipeline_mode<synchronous>, transform_indices = @transform_12, window_bounds = array<i64: 32, 32>}, {pipeline_mode = #tpu.pipeline_mode<synchronous>, transform_indices = @transform_13, window_bounds = array<i64: 1, 32>}, {pipeline_mode = #tpu.pipeline_mode<synchronous>, transform_indices = @transform_14, window_bounds = array<i64: 32, 32>}, {pipeline_mode = #tpu.pipeline_mode<synchronous>, transform_indices = @transform_15, window_bounds = array<i64: 1, 32>}, {transform_indices = @transform_16, window_bounds = array<i64: 8, 32>}]} {
    %c0_i32 = arith.constant 0 : i32
    %0 = arith.cmpi eq, %arg1, %c0_i32 : i32
    %1 = arith.extui %0 : i1 to i32
    %c0_i32_0 = arith.constant 0 : i32
    %2 = arith.cmpi ne, %1, %c0_i32_0 : i32
    scf.if %2 {
      %cst = arith.constant 0.000000e+00 : f32
      %13 = vector.broadcast %cst : f32 to vector<8x32xf32>
      %c0 = arith.constant 0 : index
      %c0_4 = arith.constant 0 : index
      %14 = vector.load %arg21[%c0, %c0_4] : memref<8x32xf32, #tpu.memory_space<vmem>>, vector<8x32xf32>
      tpu.vector_store %arg21[%c0, %c0_4], %13 {strides = array<i32>} : memref<8x32xf32, #tpu.memory_space<vmem>>, vector<8x32xf32>,
    } else {
    }
    %c2_i32 = arith.constant 2 : i32
    %3 = arith.muli %arg0, %c2_i32 : i32
    %4 = arith.addi %3, %arg1 : i32
    %5 = arith.index_cast %4 : i32 to index
    %6 = memref.load %arg3[%5] : memref<4xi32, #tpu.memory_space<smem>>
    %c0_i32_1 = arith.constant 0 : i32
    %7 = arith.cmpi sgt, %6, %c0_i32_1 : i32
    %8 = arith.extui %7 : i1 to i32
    %c0_i32_2 = arith.constant 0 : i32
    %9 = arith.cmpi ne, %8, %c0_i32_2 : i32
    scf.if %9 {
      %c0 = arith.constant 0 : index
      %c0_4 = arith.constant 0 : index
      %13 = vector.load %arg6[%c0, %c0_4] : memref<8x1xi32, #tpu.memory_space<vmem>>, vector<8x1xi32>
      %c0_5 = arith.constant 0 : index
      %c0_6 = arith.constant 0 : index
      %14 = vector.load %arg10[%c0_5, %c0_6] : memref<1x128xf32, #tpu.memory_space<vmem>>, vector<1x128xf32>
      %15 = vector.shape_cast %14 : vector<1x128xf32> to vector<1x1x128xf32>
      %c8_i32 = arith.constant 8 : i32
      %16 = arith.muli %arg0, %c8_i32 : i32
      %17 = tpu.iota {dimensions = array<i32: 0>} : vector<8x8xi32>
      %18 = vector.broadcast %16 : i32 to vector<8x8xi32>
      %19 = arith.addi %18, %17 : vector<8x8xi32>
      %20 = tpu.iota {dimensions = array<i32: 1>} : vector<8x8xi32>
      %c0_7 = arith.constant 0 : index
      %c0_8 = arith.constant 0 : index
      %21 = vector.load %arg21[%c0_7, %c0_8] : memref<8x32xf32, #tpu.memory_space<vmem>>, vector<8x32xf32>
      %cst = arith.constant 0.000000e+00 : f32
      %22 = vector.broadcast %cst : f32 to vector<8x32xf32>
      %c0_i32_9 = arith.constant 0 : i32
      %c8_i32_10 = arith.constant 8 : i32
      %23 = arith.muli %c0_i32_9, %c8_i32_10 : i32
      %24 = tpu.assume_multiple %23, 8 : i32
      %c8_i32_11 = arith.constant 8 : i32
      %25 = arith.muli %arg1, %c8_i32_11 : i32
      %26 = arith.addi %25, %24 : i32
      %27 = arith.index_cast %c0_i32_9 : i32 to index
      %c0_12 = arith.constant 0 : index
      %c0_13 = arith.constant 0 : index
      %28 = vector.load %arg5[%27, %c0_12, %c0_13] : memref<1x3x8xf32, #tpu.memory_space<vmem>>, vector<1x3x8xf32>
      %29 = vector.shape_cast %28 : vector<1x3x8xf32> to vector<3x8xf32>
      %30 = arith.index_cast %c0_i32_9 : i32 to index
      %c0_14 = arith.constant 0 : index
      %c0_15 = arith.constant 0 : index
      %31 = vector.load %arg7[%30, %c0_14, %c0_15] : memref<1x1x8xi32, #tpu.memory_space<vmem>>, vector<1x1x8xi32>
      %32 = vector.shape_cast %31 : vector<1x1x8xi32> to vector<1x8xi32>
      %cst_16 = arith.constant 0.000000e+00 : f32
      %33 = vector.broadcast %cst_16 : f32 to vector<8x8xf32>
      %c0_17 = arith.constant 0 : index
      %c0_18 = arith.constant 0 : index
      %34 = vector.load %arg4[%c0_17, %c0_18] : memref<8x3xf32, #tpu.memory_space<vmem>>, vector<8x1xf32>
      %35 = vector.extract_strided_slice %29 {offsets = [0, 0], sizes = [1, 8], strides = [1, 1]} : vector<3x8xf32> to vector<1x8xf32>
      %36 = vector.broadcast %34 : vector<8x1xf32> to vector<8x8xf32>
      %37 = vector.broadcast %35 : vector<1x8xf32> to vector<8x8xf32>
      %38 = arith.subf %36, %37 : vector<8x8xf32>
      %39 = arith.mulf %38, %38 : vector<8x8xf32>
      %40 = arith.addf %33, %39 : vector<8x8xf32>
      %c0_19 = arith.constant 0 : index
      %c1 = arith.constant 1 : index
      %41 = vector.load %arg4[%c0_19, %c1] : memref<8x3xf32, #tpu.memory_space<vmem>>, vector<8x1xf32>
      %42 = vector.extract_strided_slice %29 {offsets = [1, 0], sizes = [1, 8], strides = [1, 1]} : vector<3x8xf32> to vector<1x8xf32>
      %43 = vector.broadcast %41 : vector<8x1xf32> to vector<8x8xf32>
      %44 = vector.broadcast %42 : vector<1x8xf32> to vector<8x8xf32>
      %45 = arith.subf %43, %44 : vector<8x8xf32>
      %46 = arith.mulf %45, %45 : vector<8x8xf32>
      %47 = arith.addf %40, %46 : vector<8x8xf32>
      %c0_20 = arith.constant 0 : index
      %c2 = arith.constant 2 : index
      %48 = vector.load %arg4[%c0_20, %c2] : memref<8x3xf32, #tpu.memory_space<vmem>>, vector<8x1xf32>
      %49 = vector.extract_strided_slice %29 {offsets = [2, 0], sizes = [1, 8], strides = [1, 1]} : vector<3x8xf32> to vector<1x8xf32>
      %50 = vector.broadcast %48 : vector<8x1xf32> to vector<8x8xf32>
      %51 = vector.broadcast %49 : vector<1x8xf32> to vector<8x8xf32>
      %52 = arith.subf %50, %51 : vector<8x8xf32>
      %53 = arith.mulf %52, %52 : vector<8x8xf32>
      %54 = arith.addf %47, %53 : vector<8x8xf32>
      %55 = math.sqrt %54 : vector<8x8xf32>
      %56 = vector.broadcast %13 : vector<8x1xi32> to vector<8x8xi32>
      %57 = vector.broadcast %32 : vector<1x8xi32> to vector<8x8xi32>
      %58 = arith.cmpi eq, %56, %57 : vector<8x8xi32>
      %cst_21 = arith.constant 5.000000e+00 : f32
      %59 = vector.broadcast %cst_21 : f32 to vector<8x8xf32>
      %60 = arith.cmpf olt, %55, %59 : vector<8x8xf32>
      %61 = arith.andi %58, %60 : vector<8x8xi1>
      %62 = vector.broadcast %26 : i32 to vector<8x8xi32>
      %63 = arith.addi %62, %20 : vector<8x8xi32>
      %64 = arith.cmpi ne, %19, %63 : vector<8x8xi32>
      %65 = arith.andi %61, %64 : vector<8x8xi1>
      %cst_22 = arith.constant 0.628318548 : f32
      %66 = vector.broadcast %cst_22 : f32 to vector<8x8xf32>
      %67 = arith.mulf %55, %66 : vector<8x8xf32>
      %68 = math.cos %67 : vector<8x8xf32>
      %cst_23 = arith.constant 1.000000e+00 : f32
      %69 = vector.broadcast %cst_23 : f32 to vector<8x8xf32>
      %70 = arith.addf %68, %69 : vector<8x8xf32>
      %cst_24 = arith.constant 5.000000e-01 : f32
      %71 = vector.broadcast %cst_24 : f32 to vector<8x8xf32>
      %72 = arith.mulf %71, %70 : vector<8x8xf32>
      %73 = arith.extui %65 : vector<8x8xi1> to vector<8x8xi32>
      %74 = arith.sitofp %73 : vector<8x8xi32> to vector<8x8xf32>
      %75 = arith.mulf %72, %74 : vector<8x8xf32>
      %cst_25 = arith.constant 6.92964649 : f32
      %76 = vector.broadcast %cst_25 : f32 to vector<8x8xf32>
      %77 = arith.mulf %55, %76 : vector<8x8xf32>
      %78 = vector.shape_cast %77 : vector<8x8xf32> to vector<8x8x1xf32>
      %79 = vector.broadcast %78 : vector<8x8x1xf32> to vector<8x8x128xf32>
      %80 = vector.broadcast %15 : vector<1x1x128xf32> to vector<8x8x128xf32>
      %81 = arith.subf %79, %80 : vector<8x8x128xf32>
      %82 = arith.mulf %81, %81 : vector<8x8x128xf32>
      %cst_26 = arith.constant 0.000000e+00 : f32
      %83 = vector.broadcast %cst_26 : f32 to vector<8x8x128xf32>
      %84 = arith.subf %83, %82 : vector<8x8x128xf32>
      %85 = math.exp %84 : vector<8x8x128xf32>
      %86 = vector.shape_cast %85 : vector<8x8x128xf32> to vector<64x128xf32>
      %87 = arith.truncf %86 : vector<64x128xf32> to vector<64x128xbf16>
      %c0_27 = arith.constant 0 : index
      %c0_28 = arith.constant 0 : index
      %88 = vector.load %arg11[%c0_27, %c0_28] : memref<128x32xbf16, #tpu.memory_space<vmem>>, vector<128x32xbf16>
      %cst_29 = arith.constant dense<0.000000e+00> : vector<64x32xf32>
      %89 = tpu.matmul %87, %88, %cst_29 {dimension_numbers = #tpu.dot_dimension_numbers<[1], [0], [0], [1], [0, 0, 1, 1], [], []>} : vector<64x128xbf16>, vector<128x32xbf16>, vector<64x32xf32> -> vector<64x32xf32>
      %c0_30 = arith.constant 0 : index
      %c0_31 = arith.constant 0 : index
      %90 = vector.load %arg12[%c0_30, %c0_31] : memref<1x32xf32, #tpu.memory_space<vmem>>, vector<1x32xf32>
      %91 = vector.broadcast %90 : vector<1x32xf32> to vector<64x32xf32>
      %92 = arith.addf %89, %91 : vector<64x32xf32>
      %cst_32 = arith.constant 0.000000e+00 : f32
      %93 = vector.broadcast %cst_32 : f32 to vector<64x32xf32>
      %94 = arith.maximumf %92, %93 : vector<64x32xf32>
      %95 = math.absf %92 : vector<64x32xf32>
      %cst_33 = arith.constant 0.000000e+00 : f32
      %96 = vector.broadcast %cst_33 : f32 to vector<64x32xf32>
      %97 = arith.subf %96, %95 : vector<64x32xf32>
      %98 = math.exp %97 : vector<64x32xf32>
      %cst_34 = arith.constant 1.000000e+00 : f32
      %99 = vector.broadcast %cst_34 : f32 to vector<64x32xf32>
      %100 = arith.addf %99, %98 : vector<64x32xf32>
      %101 = math.log %100 : vector<64x32xf32>
      %102 = arith.addf %94, %101 : vector<64x32xf32>
      %cst_35 = arith.constant 0.693147182 : f32
      %103 = vector.broadcast %cst_35 : f32 to vector<64x32xf32>
      %104 = arith.subf %102, %103 : vector<64x32xf32>
      %105 = arith.truncf %104 : vector<64x32xf32> to vector<64x32xbf16>
      %c0_36 = arith.constant 0 : index
      %c0_37 = arith.constant 0 : index
      %106 = vector.load %arg13[%c0_36, %c0_37] : memref<32x32xbf16, #tpu.memory_space<vmem>>, vector<32x32xbf16>
      %cst_38 = arith.constant dense<0.000000e+00> : vector<64x32xf32>
      %107 = tpu.matmul %105, %106, %cst_38 {dimension_numbers = #tpu.dot_dimension_numbers<[1], [0], [0], [1], [0, 0, 1, 1], [], []>} : vector<64x32xbf16>, vector<32x32xbf16>, vector<64x32xf32> -> vector<64x32xf32>
      %c0_39 = arith.constant 0 : index
      %c0_40 = arith.constant 0 : index
      %108 = vector.load %arg14[%c0_39, %c0_40] : memref<1x32xf32, #tpu.memory_space<vmem>>, vector<1x32xf32>
      %109 = vector.broadcast %108 : vector<1x32xf32> to vector<64x32xf32>
      %110 = arith.addf %107, %109 : vector<64x32xf32>
      %111 = vector.shape_cast %110 : vector<64x32xf32> to vector<8x8x32xf32>
      %112 = arith.index_cast %24 : i32 to index
      %c0_41 = arith.constant 0 : index
      %113 = vector.load %arg9[%112, %c0_41] : memref<8x32xf32, #tpu.memory_space<vmem>>, vector<8x32xf32>
      %114 = arith.truncf %113 : vector<8x32xf32> to vector<8x32xbf16>
      %c0_42 = arith.constant 0 : index
      %c0_43 = arith.constant 0 : index
      %115 = vector.load %arg15[%c0_42, %c0_43] : memref<32x32xbf16, #tpu.memory_space<vmem>>, vector<32x32xbf16>
      %cst_44 = arith.constant dense<0.000000e+00> : vector<8x32xf32>
      %116 = tpu.matmul %114, %115, %cst_44 {dimension_numbers = #tpu.dot_dimension_numbers<[1], [0], [0], [1], [0, 0, 1, 1], [], []>} : vector<8x32xbf16>, vector<32x32xbf16>, vector<8x32xf32> -> vector<8x32xf32>
      %117 = vector.shape_cast %75 : vector<8x8xf32> to vector<8x8x1xf32>
      %118 = vector.broadcast %117 : vector<8x8x1xf32> to vector<8x8x32xf32>
      %119 = arith.mulf %111, %118 : vector<8x8x32xf32>
      %120 = vector.shape_cast %116 : vector<8x32xf32> to vector<1x8x32xf32>
      %121 = vector.broadcast %120 : vector<1x8x32xf32> to vector<8x8x32xf32>
      %122 = arith.mulf %119, %121 : vector<8x8x32xf32>
      %cst_45 = arith.constant dense<0.000000e+00> : vector<8x32xf32>
      %123 = vector.multi_reduction <add>, %122, %cst_45 [1] : vector<8x8x32xf32> to vector<8x32xf32>
      %124 = arith.addf %22, %123 : vector<8x32xf32>
      %c1_i32_46 = arith.constant 1 : i32
      %125 = arith.addf %21, %124 : vector<8x32xf32>
      %c0_47 = arith.constant 0 : index
      %c0_48 = arith.constant 0 : index
      %126 = vector.load %arg21[%c0_47, %c0_48] : memref<8x32xf32, #tpu.memory_space<vmem>>, vector<8x32xf32>
      tpu.vector_store %arg21[%c0_47, %c0_48], %125 {strides = array<i32>} : memref<8x32xf32, #tpu.memory_space<vmem>>, vector<8x32xf32>,
    } else {
    }
    %c1_i32 = arith.constant 1 : i32
    %10 = arith.cmpi eq, %arg1, %c1_i32 : i32
    %11 = arith.extui %10 : i1 to i32
    %c0_i32_3 = arith.constant 0 : i32
    %12 = arith.cmpi ne, %11, %c0_i32_3 : i32
    scf.if %12 {
      %c0 = arith.constant 0 : index
      %c0_4 = arith.constant 0 : index
      %13 = vector.load %arg21[%c0, %c0_4] : memref<8x32xf32, #tpu.memory_space<vmem>>, vector<8x32xf32>
      %14 = arith.truncf %13 : vector<8x32xf32> to vector<8x32xbf16>
      %c0_5 = arith.constant 0 : index
      %c0_6 = arith.constant 0 : index
      %15 = vector.load %arg16[%c0_5, %c0_6] : memref<32x32xbf16, #tpu.memory_space<vmem>>, vector<32x32xbf16>
      %cst = arith.constant dense<0.000000e+00> : vector<8x32xf32>
      %16 = tpu.matmul %14, %15, %cst {dimension_numbers = #tpu.dot_dimension_numbers<[1], [0], [0], [1], [0, 0, 1, 1], [], []>} : vector<8x32xbf16>, vector<32x32xbf16>, vector<8x32xf32> -> vector<8x32xf32>
      %c0_7 = arith.constant 0 : index
      %c0_8 = arith.constant 0 : index
      %17 = vector.load %arg17[%c0_7, %c0_8] : memref<1x32xf32, #tpu.memory_space<vmem>>, vector<1x32xf32>
      %18 = vector.broadcast %17 : vector<1x32xf32> to vector<8x32xf32>
      %19 = arith.addf %16, %18 : vector<8x32xf32>
      %cst_9 = arith.constant 0.000000e+00 : f32
      %20 = vector.broadcast %cst_9 : f32 to vector<8x32xf32>
      %21 = arith.maximumf %19, %20 : vector<8x32xf32>
      %22 = math.absf %19 : vector<8x32xf32>
      %cst_10 = arith.constant 0.000000e+00 : f32
      %23 = vector.broadcast %cst_10 : f32 to vector<8x32xf32>
      %24 = arith.subf %23, %22 : vector<8x32xf32>
      %25 = math.exp %24 : vector<8x32xf32>
      %cst_11 = arith.constant 1.000000e+00 : f32
      %26 = vector.broadcast %cst_11 : f32 to vector<8x32xf32>
      %27 = arith.addf %26, %25 : vector<8x32xf32>
      %28 = math.log %27 : vector<8x32xf32>
      %29 = arith.addf %21, %28 : vector<8x32xf32>
      %cst_12 = arith.constant 0.693147182 : f32
      %30 = vector.broadcast %cst_12 : f32 to vector<8x32xf32>
      %31 = arith.subf %29, %30 : vector<8x32xf32>
      %32 = arith.truncf %31 : vector<8x32xf32> to vector<8x32xbf16>
      %c0_13 = arith.constant 0 : index
      %c0_14 = arith.constant 0 : index
      %33 = vector.load %arg18[%c0_13, %c0_14] : memref<32x32xbf16, #tpu.memory_space<vmem>>, vector<32x32xbf16>
      %cst_15 = arith.constant dense<0.000000e+00> : vector<8x32xf32>
      %34 = tpu.matmul %32, %33, %cst_15 {dimension_numbers = #tpu.dot_dimension_numbers<[1], [0], [0], [1], [0, 0, 1, 1], [], []>} : vector<8x32xbf16>, vector<32x32xbf16>, vector<8x32xf32> -> vector<8x32xf32>
      %c0_16 = arith.constant 0 : index
      %c0_17 = arith.constant 0 : index
      %35 = vector.load %arg19[%c0_16, %c0_17] : memref<1x32xf32, #tpu.memory_space<vmem>>, vector<1x32xf32>
      %36 = vector.broadcast %35 : vector<1x32xf32> to vector<8x32xf32>
      %37 = arith.addf %34, %36 : vector<8x32xf32>
      %c0_18 = arith.constant 0 : index
      %c0_19 = arith.constant 0 : index
      %38 = vector.load %arg8[%c0_18, %c0_19] : memref<8x32xf32, #tpu.memory_space<vmem>>, vector<8x32xf32>
      %39 = arith.addf %38, %37 : vector<8x32xf32>
      %c0_20 = arith.constant 0 : index
      %c0_21 = arith.constant 0 : index
      %40 = vector.load %arg20[%c0_20, %c0_21] : memref<8x32xf32, #tpu.memory_space<vmem>>, vector<8x32xf32>
      tpu.vector_store %arg20[%c0_20, %c0_21], %39 {strides = array<i32>} : memref<8x32xf32, #tpu.memory_space<vmem>>, vector<8x32xf32>,
    } else {
    }
    return
  }
  func.func @transform_0(%arg0: i32, %arg1: i32, %arg2: memref<4xi32, #tpu.memory_space<smem>>, %arg3: memref<4xi32, #tpu.memory_space<smem>>) -> (i32, i32) {
    %c0_i32 = arith.constant 0 : i32
    %c0_i32_0 = arith.constant 0 : i32
    return %arg0, %c0_i32 : i32, i32
  }
  func.func @transform_1(%arg0: i32, %arg1: i32, %arg2: memref<4xi32, #tpu.memory_space<smem>>, %arg3: memref<4xi32, #tpu.memory_space<smem>>) -> (i32, i32, i32) {
    %c2_i32 = arith.constant 2 : i32
    %0 = arith.muli %arg0, %c2_i32 : i32
    %1 = arith.addi %0, %arg1 : i32
    %2 = arith.index_cast %1 : i32 to index
    %3 = memref.load %arg2[%2] : memref<4xi32, #tpu.memory_space<smem>>
    %c0_i32 = arith.constant 0 : i32
    %c0_i32_0 = arith.constant 0 : i32
    %c0_i32_1 = arith.constant 0 : i32
    return %3, %c0_i32, %c0_i32_0 : i32, i32, i32
  }
  func.func @transform_2(%arg0: i32, %arg1: i32, %arg2: memref<4xi32, #tpu.memory_space<smem>>, %arg3: memref<4xi32, #tpu.memory_space<smem>>) -> (i32, i32) {
    %c0_i32 = arith.constant 0 : i32
    %c0_i32_0 = arith.constant 0 : i32
    return %arg0, %c0_i32 : i32, i32
  }
  func.func @transform_3(%arg0: i32, %arg1: i32, %arg2: memref<4xi32, #tpu.memory_space<smem>>, %arg3: memref<4xi32, #tpu.memory_space<smem>>) -> (i32, i32, i32) {
    %c2_i32 = arith.constant 2 : i32
    %0 = arith.muli %arg0, %c2_i32 : i32
    %1 = arith.addi %0, %arg1 : i32
    %2 = arith.index_cast %1 : i32 to index
    %3 = memref.load %arg2[%2] : memref<4xi32, #tpu.memory_space<smem>>
    %c0_i32 = arith.constant 0 : i32
    %c0_i32_0 = arith.constant 0 : i32
    %c0_i32_1 = arith.constant 0 : i32
    return %3, %c0_i32, %c0_i32_0 : i32, i32, i32
  }
  func.func @transform_4(%arg0: i32, %arg1: i32, %arg2: memref<4xi32, #tpu.memory_space<smem>>, %arg3: memref<4xi32, #tpu.memory_space<smem>>) -> (i32, i32) {
    %c0_i32 = arith.constant 0 : i32
    %c0_i32_0 = arith.constant 0 : i32
    return %arg0, %c0_i32 : i32, i32
  }
  func.func @transform_5(%arg0: i32, %arg1: i32, %arg2: memref<4xi32, #tpu.memory_space<smem>>, %arg3: memref<4xi32, #tpu.memory_space<smem>>) -> (i32, i32) {
    %c2_i32 = arith.constant 2 : i32
    %0 = arith.muli %arg0, %c2_i32 : i32
    %1 = arith.addi %0, %arg1 : i32
    %2 = arith.index_cast %1 : i32 to index
    %3 = memref.load %arg2[%2] : memref<4xi32, #tpu.memory_space<smem>>
    %c0_i32 = arith.constant 0 : i32
    %c0_i32_0 = arith.constant 0 : i32
    return %3, %c0_i32 : i32, i32
  }
  func.func @transform_6(%arg0: i32, %arg1: i32, %arg2: memref<4xi32, #tpu.memory_space<smem>>, %arg3: memref<4xi32, #tpu.memory_space<smem>>) -> (i32, i32) {
    %c0_i32 = arith.constant 0 : i32
    %c0_i32_0 = arith.constant 0 : i32
    %c0_i32_1 = arith.constant 0 : i32
    return %c0_i32, %c0_i32_0 : i32, i32
  }
  func.func @transform_7(%arg0: i32, %arg1: i32, %arg2: memref<4xi32, #tpu.memory_space<smem>>, %arg3: memref<4xi32, #tpu.memory_space<smem>>) -> (i32, i32) {
    %c0_i32 = arith.constant 0 : i32
    %c0_i32_0 = arith.constant 0 : i32
    %c0_i32_1 = arith.constant 0 : i32
    return %c0_i32, %c0_i32_0 : i32, i32
  }
  func.func @transform_8(%arg0: i32, %arg1: i32, %arg2: memref<4xi32, #tpu.memory_space<smem>>, %arg3: memref<4xi32, #tpu.memory_space<smem>>) -> (i32, i32) {
    %c0_i32 = arith.constant 0 : i32
    %c0_i32_0 = arith.constant 0 : i32
    %c0_i32_1 = arith.constant 0 : i32
    return %c0_i32, %c0_i32_0 : i32, i32
  }
  func.func @transform_9(%arg0: i32, %arg1: i32, %arg2: memref<4xi32, #tpu.memory_space<smem>>, %arg3: memref<4xi32, #tpu.memory_space<smem>>) -> (i32, i32) {
    %c0_i32 = arith.constant 0 : i32
    %c0_i32_0 = arith.constant 0 : i32
    %c0_i32_1 = arith.constant 0 : i32
    return %c0_i32, %c0_i32_0 : i32, i32
  }
  func.func @transform_10(%arg0: i32, %arg1: i32, %arg2: memref<4xi32, #tpu.memory_space<smem>>, %arg3: memref<4xi32, #tpu.memory_space<smem>>) -> (i32, i32) {
    %c0_i32 = arith.constant 0 : i32
    %c0_i32_0 = arith.constant 0 : i32
    %c0_i32_1 = arith.constant 0 : i32
    return %c0_i32, %c0_i32_0 : i32, i32
  }
  func.func @transform_11(%arg0: i32, %arg1: i32, %arg2: memref<4xi32, #tpu.memory_space<smem>>, %arg3: memref<4xi32, #tpu.memory_space<smem>>) -> (i32, i32) {
    %c0_i32 = arith.constant 0 : i32
    %c0_i32_0 = arith.constant 0 : i32
    %c0_i32_1 = arith.constant 0 : i32
    return %c0_i32, %c0_i32_0 : i32, i32
  }
  func.func @transform_12(%arg0: i32, %arg1: i32, %arg2: memref<4xi32, #tpu.memory_space<smem>>, %arg3: memref<4xi32, #tpu.memory_space<smem>>) -> (i32, i32) {
    %c0_i32 = arith.constant 0 : i32
    %c0_i32_0 = arith.constant 0 : i32
    %c0_i32_1 = arith.constant 0 : i32
    return %c0_i32, %c0_i32_0 : i32, i32
  }
  func.func @transform_13(%arg0: i32, %arg1: i32, %arg2: memref<4xi32, #tpu.memory_space<smem>>, %arg3: memref<4xi32, #tpu.memory_space<smem>>) -> (i32, i32) {
    %c0_i32 = arith.constant 0 : i32
    %c0_i32_0 = arith.constant 0 : i32
    %c0_i32_1 = arith.constant 0 : i32
    return %c0_i32, %c0_i32_0 : i32, i32
  }
  func.func @transform_14(%arg0: i32, %arg1: i32, %arg2: memref<4xi32, #tpu.memory_space<smem>>, %arg3: memref<4xi32, #tpu.memory_space<smem>>) -> (i32, i32) {
    %c0_i32 = arith.constant 0 : i32
    %c0_i32_0 = arith.constant 0 : i32
    %c0_i32_1 = arith.constant 0 : i32
    return %c0_i32, %c0_i32_0 : i32, i32
  }
  func.func @transform_15(%arg0: i32, %arg1: i32, %arg2: memref<4xi32, #tpu.memory_space<smem>>, %arg3: memref<4xi32, #tpu.memory_space<smem>>) -> (i32, i32) {
    %c0_i32 = arith.constant 0 : i32
    %c0_i32_0 = arith.constant 0 : i32
    %c0_i32_1 = arith.constant 0 : i32
    return %c0_i32, %c0_i32_0 : i32, i32
  }
  func.func @transform_16(%arg0: i32, %arg1: i32, %arg2: memref<4xi32, #tpu.memory_space<smem>>, %arg3: memref<4xi32, #tpu.memory_space<smem>>) -> (i32, i32) {
    %c0_i32 = arith.constant 0 : i32
    %c0_i32_0 = arith.constant 0 : i32
    return %arg0, %c0_i32 : i32, i32
  }
}

</mosaic_0001>

<llo_original>
// kernel: tpu_custom_call.1
$region0: #{tpu_custom_call.1}
  #allocation0 [shape = 'u32[]', space=smem, size = 0x4, offset = 0x4, fixed_abs, tag = 'smem constant byte address 0x4 - core index']
  #allocation1 [shape = 'u32[144,128]{1,0:T(1,128)}', space=vmem, size = 0x12000, scoped, tag = 'internal scratch']
  #allocation2 [shape = 'f32[8,32]{1,0:T(8,128)}', space=vmem, size = 0x1000, scoped, tag = 'scratch operand']
  #allocation3 [shape = 's32[1]{0}', space=sflag, size = 0x4, scoped, tag = 'scoped memory for tpu_custom_call.1']
  #allocation4 [shape = 'u8[512]{0}', space=smem, size = 0x200, scoped, tag = 'prefetched SMEM operand 0']
  #allocation5 [shape = 'u8[512]{0}', space=smem, size = 0x200, scoped, tag = 'prefetched SMEM operand 1']
  %s0 = inlined_call_operand.vmem [shape: s32[4], index: 0, kind: input, shape index: {}]
  %s1 = inlined_call_operand.vmem [shape: s32[4], index: 1, kind: input, shape index: {}]
  %s2 = inlined_call_operand.vmem [shape: f32[16,3], index: 2, kind: input, shape index: {}]
  %s3 = inlined_call_operand.vmem [shape: f32[2,3,8], index: 3, kind: input, shape index: {}]
  %s4 = inlined_call_operand.vmem [shape: s32[16,1], index: 4, kind: input, shape index: {}]
  %s5 = inlined_call_operand.vmem [shape: s32[2,1,8], index: 5, kind: input, shape index: {}]
  %s6 = inlined_call_operand.vmem [shape: f32[16,32], index: 6, kind: input, shape index: {}]
  %s7 = inlined_call_operand.vmem [shape: f32[16,32], index: 7, kind: input, shape index: {}]
  %s8 = inlined_call_operand.vmem [shape: f32[1,128], index: 8, kind: input, shape index: {}]
  %s9 = inlined_call_operand.vmem [shape: bf16[128,32], index: 9, kind: input, shape index: {}]
  %s10 = inlined_call_operand.vmem [shape: f32[1,32], index: 10, kind: input, shape index: {}]
  %s11 = inlined_call_operand.vmem [shape: bf16[32,32], index: 11, kind: input, shape index: {}]
  %s12 = inlined_call_operand.vmem [shape: f32[1,32], index: 12, kind: input, shape index: {}]
  %s13 = inlined_call_operand.vmem [shape: bf16[32,32], index: 13, kind: input, shape index: {}]
  %s14 = inlined_call_operand.vmem [shape: bf16[32,32], index: 14, kind: input, shape index: {}]
  %s15 = inlined_call_operand.vmem [shape: f32[1,32], index: 15, kind: input, shape index: {}]
  %s16 = inlined_call_operand.vmem [shape: bf16[32,32], index: 16, kind: input, shape index: {}]
  %s17 = inlined_call_operand.vmem [shape: f32[1,32], index: 17, kind: input, shape index: {}]
  %s18 = inlined_call_operand.hbm [shape: f32[16,32], index: 18, kind: output, shape index: {}]
  %s19 = sld [smem:[#allocation0]]
  $region109: #{tpu_custom_call.1} parent=0
    _
  %s21 = ssub.s32 1, %s19
  %s22 = scalar_select 0, %s21, %s19
  %s23 = sshll.u32 %s0, 4
  %s24 = int_to_ptr.vmem [resolvable:$true] %s23
  %26 = dma.vmem_to_smem %s24, 16, [#allocation4], [#allocation3]
  %s27 = sshll.u32 %s1, 4
  %s28 = int_to_ptr.vmem [resolvable:$true] %s27
  %30 = dma.vmem_to_smem %s28, 16, [#allocation5], [#allocation3]
  %31 = dma.done [#allocation3], 32
  %32 = sfence
  $region1: #{tpu_custom_call.1} parent=0
    #allocation6 [shape = 'u8[8192]{0}', space=vmem, size = 0x2000, scoped, tag = 'output window, operand 0']
    #allocation7 [shape = 's32[2]{0}', space=sflag, size = 0x8, scoped, tag = 'scoped memory for tpu_custom_call.1']
    %33 = vsyncpa [#allocation7], 0
    %s34 = scalar_lea.sflag [#allocation7], 1
    %35 = vsyncpa %s34, 0
    loop: start=0, step=1, limit=6
    $region2: #{tpu_custom_call.1} parent=1 // loop_pre_header
      _
    $region3: #{tpu_custom_call.1} parent=1 // loop_header
      %s37 = sphi 0, %s41
      %p38 = scmp.ge.s32.totalorder %s37, 6
      %s44 = sphi 0, %s56
      %s45 = sphi 0, %s52
      %s46 = sphi 0, %s44
      %s47 = sphi 0, %s45
      %s48 = sphi 0, %s46
      %s49 = sphi 0, %s47
      %s59 = sphi 0, %s61
      %s62 = sphi 0, %s59
      %s63 = sphi 0, %s62
      %s79 = sphi 0, %s63
      %s91 = sphi 0, %s93
      %s94 = sphi 0, %s91
      %s95 = sphi 0, %s94
      %s111 = sphi 0, %s95
      %s117 = sphi 0, %s119
      %s120 = sphi 0, %s117
      %s121 = sphi 0, %s120
      %s137 = sphi 0, %s121
      %s149 = sphi 0, %s151
      %s152 = sphi 0, %s149
      %s153 = sphi 0, %s152
      %s169 = sphi 0, %s153
      %s175 = sphi 0, %s177
      %s178 = sphi 0, %s175
      %s179 = sphi 0, %s178
      %s195 = sphi 0, %s179
      %s207 = sphi 0, %s209
      %s210 = sphi 0, %s207
      %s211 = sphi 0, %s210
      %s227 = sphi 0, %s211
      %s231 = sphi 0, %s231
      %s233 = sphi 0, %s231
      %s234 = sphi 0, %s233
      %s248 = sphi 0, %s234
      %s252 = sphi 0, %s252
      %s254 = sphi 0, %s252
      %s255 = sphi 0, %s254
      %s269 = sphi 0, %s255
      %s273 = sphi 0, %s273
      %s275 = sphi 0, %s273
      %s276 = sphi 0, %s275
      %s290 = sphi 0, %s276
      %s294 = sphi 0, %s294
      %s296 = sphi 0, %s294
      %s297 = sphi 0, %s296
      %s311 = sphi 0, %s297
      %s315 = sphi 0, %s315
      %s317 = sphi 0, %s315
      %s318 = sphi 0, %s317
      %s332 = sphi 0, %s318
      %s336 = sphi 0, %s336
      %s338 = sphi 0, %s336
      %s339 = sphi 0, %s338
      %s353 = sphi 0, %s339
      %s357 = sphi 0, %s357
      %s359 = sphi 0, %s357
      %s360 = sphi 0, %s359
      %s374 = sphi 0, %s360
      %s378 = sphi 0, %s378
      %s380 = sphi 0, %s378
      %s381 = sphi 0, %s380
      %s395 = sphi 0, %s381
      %s399 = sphi 0, %s399
      %s401 = sphi 0, %s399
      %s402 = sphi 0, %s401
      %s416 = sphi 0, %s402
      %s420 = sphi 0, %s420
      %s422 = sphi 0, %s420
      %s423 = sphi 0, %s422
      %s437 = sphi 0, %s423
      %s443 = sphi 0, %s445
      %s446 = sphi 0, %s443
      %s447 = sphi 0, %s446
      %s463 = sphi 0, %s447
    $region4: #{tpu_custom_call.1} parent=1 // loop_header_branch
      %40 = sbr.rel (%p38) target = $region8
    $region5: #{tpu_custom_call.1} parent=1 // loop_body
      %s42 = ssub.s32 %s37, 1
      %s43 = ssub.s32 %s37, 2
      %s50 = sadd.s32 1, %s45
      %p51 = scmp.ge.s32.totalorder %s50, 2
      %s52 = scalar_select %p51, 0, %s50
      %s53 = sadd.s32 1, %s44
      %s54 = scalar_select %p51, %s53, %s44
      %p55 = scmp.ge.s32.totalorder %s54, 2
      %s56 = scalar_select %p55, 0, %s54
      %s57 = ssub.s32 %s44, %s56
      %p58 = scmp.eq.s32.totalorder %s57, 0
      %s60 = sadd.s32 %s59, 1
      %s61 = scalar_select %p58, %s59, %s60
      %p64 = pneg %p58
      %p65 = scmp.eq.s32.totalorder %s37, 3
      %p66 = por %p64, %p65
      %p67 = scmp.ne.s32.totalorder %s59, %s62
      %p68 = scmp.eq.s32.totalorder %s37, 0
      %p69 = por %p67, %p68
      %p70 = scmp.ne.s32.totalorder %s59, %s62
      %p71 = scmp.eq.s32.totalorder %s42, 3
      %p72 = por %p70, %p71
      %p73 = scmp.ne.s32.totalorder %s62, %s63
      %p74 = scmp.eq.s32.totalorder %s42, 0
      %p75 = por %p73, %p74
      %p76 = scmp.ne.s32.totalorder %s62, %s63
      %p77 = scmp.eq.s32.totalorder %s43, 3
      %p78 = por %p76, %p77
      %p80 = scmp.ne.s32.totalorder %s63, %s79
      %p81 = scmp.eq.s32.totalorder %s43, 0
      %p82 = por %p80, %p81
      %s83 = smul.u32 %s44, 2
      %s84 = sadd.s32 %s83, %s45
      %s85 = sld [smem:[#allocation4 + %s84]]
      %s86 = smul.u32 %s56, 2
      %s87 = sadd.s32 %s86, %s52
      %s88 = sld [smem:[#allocation4 + %s87]]
      %s89 = ssub.s32 %s85, %s88
      %p90 = scmp.eq.s32.totalorder %s89, 0
      %s92 = sadd.s32 %s91, 1
      %s93 = scalar_select %p90, %s91, %s92
      %p96 = pneg %p90
      %p97 = scmp.eq.s32.totalorder %s37, 3
      %p98 = por %p96, %p97
      %p99 = scmp.ne.s32.totalorder %s91, %s94
      %p100 = scmp.eq.s32.totalorder %s37, 0
      %p101 = por %p99, %p100
      %p102 = scmp.ne.s32.totalorder %s91, %s94
      %p103 = scmp.eq.s32.totalorder %s42, 3
      %p104 = por %p102, %p103
      %p105 = scmp.ne.s32.totalorder %s94, %s95
      %p106 = scmp.eq.s32.totalorder %s42, 0
      %p107 = por %p105, %p106
      %p108 = scmp.ne.s32.totalorder %s94, %s95
      %p109 = scmp.eq.s32.totalorder %s43, 3
      %p110 = por %p108, %p109
      %p112 = scmp.ne.s32.totalorder %s95, %s111
      %p113 = scmp.eq.s32.totalorder %s43, 0
      %p114 = por %p112, %p113
      %s115 = ssub.s32 %s44, %s56
      %p116 = scmp.eq.s32.totalorder %s115, 0
      %s118 = sadd.s32 %s117, 1
      %s119 = scalar_select %p116, %s117, %s118
      %p122 = pneg %p116
      %p123 = scmp.eq.s32.totalorder %s37, 3
      %p124 = por %p122, %p123
      %p125 = scmp.ne.s32.totalorder %s117, %s120
      %p126 = scmp.eq.s32.totalorder %s37, 0
      %p127 = por %p125, %p126
      %p128 = scmp.ne.s32.totalorder %s117, %s120
      %p129 = scmp.eq.s32.totalorder %s42, 3
      %p130 = por %p128, %p129
      %p131 = scmp.ne.s32.totalorder %s120, %s121
      %p132 = scmp.eq.s32.totalorder %s42, 0
      %p133 = por %p131, %p132
      %p134 = scmp.ne.s32.totalorder %s120, %s121
      %p135 = scmp.eq.s32.totalorder %s43, 3
      %p136 = por %p134, %p135
      %p138 = scmp.ne.s32.totalorder %s121, %s137
      %p139 = scmp.eq.s32.totalorder %s43, 0
      %p140 = por %p138, %p139
      %s141 = smul.u32 %s44, 2
      %s142 = sadd.s32 %s141, %s45
      %s143 = sld [smem:[#allocation4 + %s142]]
      %s144 = smul.u32 %s56, 2
      %s145 = sadd.s32 %s144, %s52
      %s146 = sld [smem:[#allocation4 + %s145]]
      %s147 = ssub.s32 %s143, %s146
      %p148 = scmp.eq.s32.totalorder %s147, 0
      %s150 = sadd.s32 %s149, 1
      %s151 = scalar_select %p148, %s149, %s150
      %p154 = pneg %p148
      %p155 = scmp.eq.s32.totalorder %s37, 3
      %p156 = por %p154, %p155
      %p157 = scmp.ne.s32.totalorder %s149, %s152
      %p158 = scmp.eq.s32.totalorder %s37, 0
      %p159 = por %p157, %p158
      %p160 = scmp.ne.s32.totalorder %s149, %s152
      %p161 = scmp.eq.s32.totalorder %s42, 3
      %p162 = por %p160, %p161
      %p163 = scmp.ne.s32.totalorder %s152, %s153
      %p164 = scmp.eq.s32.totalorder %s42, 0
      %p165 = por %p163, %p164
      %p166 = scmp.ne.s32.totalorder %s152, %s153
      %p167 = scmp.eq.s32.totalorder %s43, 3
      %p168 = por %p166, %p167
      %p170 = scmp.ne.s32.totalorder %s153, %s169
      %p171 = scmp.eq.s32.totalorder %s43, 0
      %p172 = por %p170, %p171
      %s173 = ssub.s32 %s44, %s56
      %p174 = scmp.eq.s32.totalorder %s173, 0
      %s176 = sadd.s32 %s175, 1
      %s177 = scalar_select %p174, %s175, %s176
      %p180 = pneg %p174
      %p181 = scmp.eq.s32.totalorder %s37, 3
      %p182 = por %p180, %p181
      %p183 = scmp.ne.s32.totalorder %s175, %s178
      %p184 = scmp.eq.s32.totalorder %s37, 0
      %p185 = por %p183, %p184
      %p186 = scmp.ne.s32.totalorder %s175, %s178
      %p187 = scmp.eq.s32.totalorder %s42, 3
      %p188 = por %p186, %p187
      %p189 = scmp.ne.s32.totalorder %s178, %s179
      %p190 = scmp.eq.s32.totalorder %s42, 0
      %p191 = por %p189, %p190
      %p192 = scmp.ne.s32.totalorder %s178, %s179
      %p193 = scmp.eq.s32.totalorder %s43, 3
      %p194 = por %p192, %p193
      %p196 = scmp.ne.s32.totalorder %s179, %s195
      %p197 = scmp.eq.s32.totalorder %s43, 0
      %p198 = por %p196, %p197
      %s199 = smul.u32 %s44, 2
      %s200 = sadd.s32 %s199, %s45
      %s201 = sld [smem:[#allocation4 + %s200]]
      %s202 = smul.u32 %s56, 2
      %s203 = sadd.s32 %s202, %s52
      %s204 = sld [smem:[#allocation4 + %s203]]
      %s205 = ssub.s32 %s201, %s204
      %p206 = scmp.eq.s32.totalorder %s205, 0
      %s208 = sadd.s32 %s207, 1
      %s209 = scalar_select %p206, %s207, %s208
      %p212 = pneg %p206
      %p213 = scmp.eq.s32.totalorder %s37, 3
      %p214 = por %p212, %p213
      %p215 = scmp.ne.s32.totalorder %s207, %s210
      %p216 = scmp.eq.s32.totalorder %s37, 0
      %p217 = por %p215, %p216
      %p218 = scmp.ne.s32.totalorder %s207, %s210
      %p219 = scmp.eq.s32.totalorder %s42, 3
      %p220 = por %p218, %p219
      %p221 = scmp.ne.s32.totalorder %s210, %s211
      %p222 = scmp.eq.s32.totalorder %s42, 0
      %p223 = por %p221, %p222
      %p224 = scmp.ne.s32.totalorder %s210, %s211
      %p225 = scmp.eq.s32.totalorder %s43, 3
      %p226 = por %p224, %p225
      %p228 = scmp.ne.s32.totalorder %s211, %s227
      %p229 = scmp.eq.s32.totalorder %s43, 0
      %p230 = por %p228, %p229
      %s232 = sadd.s32 %s231, 1
      %p235 = scmp.eq.s32.totalorder %s37, 3
      %p236 = scmp.ne.s32.totalorder %s231, %s233
      %p237 = scmp.eq.s32.totalorder %s37, 0
      %p238 = por %p236, %p237
      %p239 = scmp.ne.s32.totalorder %s231, %s233
      %p240 = scmp.eq.s32.totalorder %s42, 3
      %p241 = por %p239, %p240
      %p242 = scmp.ne.s32.totalorder %s233, %s234
      %p243 = scmp.eq.s32.totalorder %s42, 0
      %p244 = por %p242, %p243
      %p245 = scmp.ne.s32.totalorder %s233, %s234
      %p246 = scmp.eq.s32.totalorder %s43, 3
      %p247 = por %p245, %p246
      %p249 = scmp.ne.s32.totalorder %s234, %s248
      %p250 = scmp.eq.s32.totalorder %s43, 0
      %p251 = por %p249, %p250
      %s253 = sadd.s32 %s252, 1
      %p256 = scmp.eq.s32.totalorder %s37, 3
      %p257 = scmp.ne.s32.totalorder %s252, %s254
      %p258 = scmp.eq.s32.totalorder %s37, 0
      %p259 = por %p257, %p258
      %p260 = scmp.ne.s32.totalorder %s252, %s254
      %p261 = scmp.eq.s32.totalorder %s42, 3
      %p262 = por %p260, %p261
      %p263 = scmp.ne.s32.totalorder %s254, %s255
      %p264 = scmp.eq.s32.totalorder %s42, 0
      %p265 = por %p263, %p264
      %p266 = scmp.ne.s32.totalorder %s254, %s255
      %p267 = scmp.eq.s32.totalorder %s43, 3
      %p268 = por %p266, %p267
      %p270 = scmp.ne.s32.totalorder %s255, %s269
      %p271 = scmp.eq.s32.totalorder %s43, 0
      %p272 = por %p270, %p271
      %s274 = sadd.s32 %s273, 1
      %p277 = scmp.eq.s32.totalorder %s37, 3
      %p278 = scmp.ne.s32.totalorder %s273, %s275
      %p279 = scmp.eq.s32.totalorder %s37, 0
      %p280 = por %p278, %p279
      %p281 = scmp.ne.s32.totalorder %s273, %s275
      %p282 = scmp.eq.s32.totalorder %s42, 3
      %p283 = por %p281, %p282
      %p284 = scmp.ne.s32.totalorder %s275, %s276
      %p285 = scmp.eq.s32.totalorder %s42, 0
      %p286 = por %p284, %p285
      %p287 = scmp.ne.s32.totalorder %s275, %s276
      %p288 = scmp.eq.s32.totalorder %s43, 3
      %p289 = por %p287, %p288
      %p291 = scmp.ne.s32.totalorder %s276, %s290
      %p292 = scmp.eq.s32.totalorder %s43, 0
      %p293 = por %p291, %p292
      %s295 = sadd.s32 %s294, 1
      %p298 = scmp.eq.s32.totalorder %s37, 3
      %p299 = scmp.ne.s32.totalorder %s294, %s296
      %p300 = scmp.eq.s32.totalorder %s37, 0
      %p301 = por %p299, %p300
      %p302 = scmp.ne.s32.totalorder %s294, %s296
      %p303 = scmp.eq.s32.totalorder %s42, 3
      %p304 = por %p302, %p303
      %p305 = scmp.ne.s32.totalorder %s296, %s297
      %p306 = scmp.eq.s32.totalorder %s42, 0
      %p307 = por %p305, %p306
      %p308 = scmp.ne.s32.totalorder %s296, %s297
      %p309 = scmp.eq.s32.totalorder %s43, 3
      %p310 = por %p308, %p309
      %p312 = scmp.ne.s32.totalorder %s297, %s311
      %p313 = scmp.eq.s32.totalorder %s43, 0
      %p314 = por %p312, %p313
      %s316 = sadd.s32 %s315, 1
      %p319 = scmp.eq.s32.totalorder %s37, 3
      %p320 = scmp.ne.s32.totalorder %s315, %s317
      %p321 = scmp.eq.s32.totalorder %s37, 0
      %p322 = por %p320, %p321
      %p323 = scmp.ne.s32.totalorder %s315, %s317
      %p324 = scmp.eq.s32.totalorder %s42, 3
      %p325 = por %p323, %p324
      %p326 = scmp.ne.s32.totalorder %s317, %s318
      %p327 = scmp.eq.s32.totalorder %s42, 0
      %p328 = por %p326, %p327
      %p329 = scmp.ne.s32.totalorder %s317, %s318
      %p330 = scmp.eq.s32.totalorder %s43, 3
      %p331 = por %p329, %p330
      %p333 = scmp.ne.s32.totalorder %s318, %s332
      %p334 = scmp.eq.s32.totalorder %s43, 0
      %p335 = por %p333, %p334
      %s337 = sadd.s32 %s336, 1
      %p340 = scmp.eq.s32.totalorder %s37, 3
      %p341 = scmp.ne.s32.totalorder %s336, %s338
      %p342 = scmp.eq.s32.totalorder %s37, 0
      %p343 = por %p341, %p342
      %p344 = scmp.ne.s32.totalorder %s336, %s338
      %p345 = scmp.eq.s32.totalorder %s42, 3
      %p346 = por %p344, %p345
      %p347 = scmp.ne.s32.totalorder %s338, %s339
      %p348 = scmp.eq.s32.totalorder %s42, 0
      %p349 = por %p347, %p348
      %p350 = scmp.ne.s32.totalorder %s338, %s339
      %p351 = scmp.eq.s32.totalorder %s43, 3
      %p352 = por %p350, %p351
      %p354 = scmp.ne.s32.totalorder %s339, %s353
      %p355 = scmp.eq.s32.totalorder %s43, 0
      %p356 = por %p354, %p355
      %s358 = sadd.s32 %s357, 1
      %p361 = scmp.eq.s32.totalorder %s37, 3
      %p362 = scmp.ne.s32.totalorder %s357, %s359
      %p363 = scmp.eq.s32.totalorder %s37, 0
      %p364 = por %p362, %p363
      %p365 = scmp.ne.s32.totalorder %s357, %s359
      %p366 = scmp.eq.s32.totalorder %s42, 3
      %p367 = por %p365, %p366
      %p368 = scmp.ne.s32.totalorder %s359, %s360
      %p369 = scmp.eq.s32.totalorder %s42, 0
      %p370 = por %p368, %p369
      %p371 = scmp.ne.s32.totalorder %s359, %s360
      %p372 = scmp.eq.s32.totalorder %s43, 3
      %p373 = por %p371, %p372
      %p375 = scmp.ne.s32.totalorder %s360, %s374
      %p376 = scmp.eq.s32.totalorder %s43, 0
      %p377 = por %p375, %p376
      %s379 = sadd.s32 %s378, 1
      %p382 = scmp.eq.s32.totalorder %s37, 3
      %p383 = scmp.ne.s32.totalorder %s378, %s380
      %p384 = scmp.eq.s32.totalorder %s37, 0
      %p385 = por %p383, %p384
      %p386 = scmp.ne.s32.totalorder %s378, %s380
      %p387 = scmp.eq.s32.totalorder %s42, 3
      %p388 = por %p386, %p387
      %p389 = scmp.ne.s32.totalorder %s380, %s381
      %p390 = scmp.eq.s32.totalorder %s42, 0
      %p391 = por %p389, %p390
      %p392 = scmp.ne.s32.totalorder %s380, %s381
      %p393 = scmp.eq.s32.totalorder %s43, 3
      %p394 = por %p392, %p393
      %p396 = scmp.ne.s32.totalorder %s381, %s395
      %p397 = scmp.eq.s32.totalorder %s43, 0
      %p398 = por %p396, %p397
      %s400 = sadd.s32 %s399, 1
      %p403 = scmp.eq.s32.totalorder %s37, 3
      %p404 = scmp.ne.s32.totalorder %s399, %s401
      %p405 = scmp.eq.s32.totalorder %s37, 0
      %p406 = por %p404, %p405
      %p407 = scmp.ne.s32.totalorder %s399, %s401
      %p408 = scmp.eq.s32.totalorder %s42, 3
      %p409 = por %p407, %p408
      %p410 = scmp.ne.s32.totalorder %s401, %s402
      %p411 = scmp.eq.s32.totalorder %s42, 0
      %p412 = por %p410, %p411
      %p413 = scmp.ne.s32.totalorder %s401, %s402
      %p414 = scmp.eq.s32.totalorder %s43, 3
      %p415 = por %p413, %p414
      %p417 = scmp.ne.s32.totalorder %s402, %s416
      %p418 = scmp.eq.s32.totalorder %s43, 0
      %p419 = por %p417, %p418
      %s421 = sadd.s32 %s420, 1
      %p424 = scmp.eq.s32.totalorder %s37, 3
      %p425 = scmp.ne.s32.totalorder %s420, %s422
      %p426 = scmp.eq.s32.totalorder %s37, 0
      %p427 = por %p425, %p426
      %p428 = scmp.ne.s32.totalorder %s420, %s422
      %p429 = scmp.eq.s32.totalorder %s42, 3
      %p430 = por %p428, %p429
      %p431 = scmp.ne.s32.totalorder %s422, %s423
      %p432 = scmp.eq.s32.totalorder %s42, 0
      %p433 = por %p431, %p432
      %p434 = scmp.ne.s32.totalorder %s422, %s423
      %p435 = scmp.eq.s32.totalorder %s43, 3
      %p436 = por %p434, %p435
      %p438 = scmp.ne.s32.totalorder %s423, %s437
      %p439 = scmp.eq.s32.totalorder %s43, 0
      %p440 = por %p438, %p439
      %s441 = ssub.s32 %s44, %s56
      %p442 = scmp.eq.s32.totalorder %s441, 0
      %s444 = sadd.s32 %s443, 1
      %s445 = scalar_select %p442, %s443, %s444
      %p448 = pneg %p442
      %p449 = scmp.eq.s32.totalorder %s37, 3
      %p450 = por %p448, %p449
      %p451 = scmp.ne.s32.totalorder %s443, %s446
      %p452 = scmp.eq.s32.totalorder %s37, 0
      %p453 = por %p451, %p452
      %p454 = scmp.ne.s32.totalorder %s443, %s446
      %p455 = scmp.eq.s32.totalorder %s42, 3
      %p456 = por %p454, %p455
      %p457 = scmp.ne.s32.totalorder %s446, %s447
      %p458 = scmp.eq.s32.totalorder %s42, 0
      %p459 = por %p457, %p458
      %p460 = scmp.ne.s32.totalorder %s446, %s447
      %p461 = scmp.eq.s32.totalorder %s43, 3
      %p462 = por %p460, %p461
      %p464 = scmp.ne.s32.totalorder %s447, %s463
      %p465 = scmp.eq.s32.totalorder %s43, 0
      %p466 = por %p464, %p465
      %p467 = scmp.le.s32.totalorder 1, %s37
      %p468 = scmp.lt.s32.totalorder %s37, 5
      %p469 = pnand %p467, %p468
      %p470 = pneg %p469
      // Predicated region
      $region9: #{tpu_custom_call.1} parent=5 // pred_check
        _
      $region10: #{tpu_custom_call.1} parent=5 // pred_check_branch
        %472 = sbr.rel (%p469) target = $region12
      $region11: #{tpu_custom_call.1} parent=5 // pred_region
        %s473 = ssub.s32 %s37, 1
        // Predicated region
        $region13: #{tpu_custom_call.1} parent=11 // pred_check
          %p474 = pneg %p244
        $region14: #{tpu_custom_call.1} parent=11 // pred_check_branch
          %476 = sbr.rel (%p474) target = $region16
        $region15: #{tpu_custom_call.1} parent=11 // pred_region
          _
        $region16: #{tpu_custom_call.1} parent=11 // pred_fallthru
          _
        // Predicated region
        $region17: #{tpu_custom_call.1} parent=11 // pred_check
          %p477 = pneg %p265
        $region18: #{tpu_custom_call.1} parent=11 // pred_check_branch
          %479 = sbr.rel (%p477) target = $region20
        $region19: #{tpu_custom_call.1} parent=11 // pred_region
          _
        $region20: #{tpu_custom_call.1} parent=11 // pred_fallthru
          _
        // Predicated region
        $region21: #{tpu_custom_call.1} parent=11 // pred_check
          %p480 = pneg %p286
        $region22: #{tpu_custom_call.1} parent=11 // pred_check_branch
          %482 = sbr.rel (%p480) target = $region24
        $region23: #{tpu_custom_call.1} parent=11 // pred_region
          _
        $region24: #{tpu_custom_call.1} parent=11 // pred_fallthru
          _
        // Predicated region
        $region25: #{tpu_custom_call.1} parent=11 // pred_check
          %p483 = pneg %p307
        $region26: #{tpu_custom_call.1} parent=11 // pred_check_branch
          %485 = sbr.rel (%p483) target = $region28
        $region27: #{tpu_custom_call.1} parent=11 // pred_region
          _
        $region28: #{tpu_custom_call.1} parent=11 // pred_fallthru
          _
        // Predicated region
        $region29: #{tpu_custom_call.1} parent=11 // pred_check
          %p486 = pneg %p328
        $region30: #{tpu_custom_call.1} parent=11 // pred_check_branch
          %488 = sbr.rel (%p486) target = $region32
        $region31: #{tpu_custom_call.1} parent=11 // pred_region
          _
        $region32: #{tpu_custom_call.1} parent=11 // pred_fallthru
          _
        // Predicated region
        $region33: #{tpu_custom_call.1} parent=11 // pred_check
          %p489 = pneg %p349
        $region34: #{tpu_custom_call.1} parent=11 // pred_check_branch
          %491 = sbr.rel (%p489) target = $region36
        $region35: #{tpu_custom_call.1} parent=11 // pred_region
          _
        $region36: #{tpu_custom_call.1} parent=11 // pred_fallthru
          _
        // Predicated region
        $region37: #{tpu_custom_call.1} parent=11 // pred_check
          %p492 = pneg %p370
        $region38: #{tpu_custom_call.1} parent=11 // pred_check_branch
          %494 = sbr.rel (%p492) target = $region40
        $region39: #{tpu_custom_call.1} parent=11 // pred_region
          _
        $region40: #{tpu_custom_call.1} parent=11 // pred_fallthru
          _
        // Predicated region
        $region41: #{tpu_custom_call.1} parent=11 // pred_check
          %p495 = pneg %p391
        $region42: #{tpu_custom_call.1} parent=11 // pred_check_branch
          %497 = sbr.rel (%p495) target = $region44
        $region43: #{tpu_custom_call.1} parent=11 // pred_region
          _
        $region44: #{tpu_custom_call.1} parent=11 // pred_fallthru
          _
        // Predicated region
        $region45: #{tpu_custom_call.1} parent=11 // pred_check
          %p498 = pneg %p412
        $region46: #{tpu_custom_call.1} parent=11 // pred_check_branch
          %500 = sbr.rel (%p498) target = $region48
        $region47: #{tpu_custom_call.1} parent=11 // pred_region
          _
        $region48: #{tpu_custom_call.1} parent=11 // pred_fallthru
          _
        // Predicated region
        $region49: #{tpu_custom_call.1} parent=11 // pred_check
          %p501 = pneg %p433
        $region50: #{tpu_custom_call.1} parent=11 // pred_check_branch
          %503 = sbr.rel (%p501) target = $region52
        $region51: #{tpu_custom_call.1} parent=11 // pred_region
          _
        $region52: #{tpu_custom_call.1} parent=11 // pred_fallthru
          _
      $region12: #{tpu_custom_call.1} parent=5 // pred_fallthru
        _
      %p504 = scmp.lt.s32.totalorder %s37, 4
      // Predicated region
      $region53: #{tpu_custom_call.1} parent=5 // pred_check
        %p505 = pneg %p504
      $region54: #{tpu_custom_call.1} parent=5 // pred_check_branch
        %507 = sbr.rel (%p505) target = $region56
      $region55: #{tpu_custom_call.1} parent=5 // pred_region
        // Predicated region
        $region57: #{tpu_custom_call.1} parent=55 // pred_check
          %p508 = pneg %p69
        $region58: #{tpu_custom_call.1} parent=55 // pred_check_branch
          %510 = sbr.rel (%p508) target = $region60
        $region59: #{tpu_custom_call.1} parent=55 // pred_region
          %p511 = scmp.lt.s32.totalorder %s44, 1
          %s512 = scalar_select %p511, %s44, 1
          %s513 = smul.addr %s512, 8
          %s514 = scalar_lea.vmem %s2, %s513
        $region60: #{tpu_custom_call.1} parent=55 // pred_fallthru
          _
        // Predicated region
        $region61: #{tpu_custom_call.1} parent=55 // pred_check
          %p515 = pneg %p101
        $region62: #{tpu_custom_call.1} parent=55 // pred_check_branch
          %517 = sbr.rel (%p515) target = $region64
        $region63: #{tpu_custom_call.1} parent=55 // pred_region
          %s518 = smul.u32 %s44, 2
          %s519 = sadd.s32 %s518, %s45
          %s520 = sld [smem:[#allocation4 + %s519]]
          %p521 = scmp.lt.s32.totalorder %s520, 1
          %s522 = scalar_select %p521, %s520, 1
          %s523 = smul.addr %s522, 4
          %s524 = scalar_lea.vmem %s3, %s523
          %s525 = smul.u32 %s44, 2
          %s526 = sadd.s32 %s525, %s45
          %s527 = sld [smem:[#allocation4 + %s526]]
        $region64: #{tpu_custom_call.1} parent=55 // pred_fallthru
          _
        // Predicated region
        $region65: #{tpu_custom_call.1} parent=55 // pred_check
          %p528 = pneg %p127
        $region66: #{tpu_custom_call.1} parent=55 // pred_check_branch
          %530 = sbr.rel (%p528) target = $region68
        $region67: #{tpu_custom_call.1} parent=55 // pred_region
          %p531 = scmp.lt.s32.totalorder %s44, 1
          %s532 = scalar_select %p531, %s44, 1
          %s533 = smul.addr %s532, 8
          %s534 = scalar_lea.vmem %s4, %s533
        $region68: #{tpu_custom_call.1} parent=55 // pred_fallthru
          _
        // Predicated region
        $region69: #{tpu_custom_call.1} parent=55 // pred_check
          %p535 = pneg %p159
        $region70: #{tpu_custom_call.1} parent=55 // pred_check_branch
          %537 = sbr.rel (%p535) target = $region72
        $region71: #{tpu_custom_call.1} parent=55 // pred_region
          %s538 = smul.u32 %s44, 2
          %s539 = sadd.s32 %s538, %s45
          %s540 = sld [smem:[#allocation4 + %s539]]
          %p541 = scmp.lt.s32.totalorder %s540, 1
          %s542 = scalar_select %p541, %s540, 1
          %s543 = scalar_lea.vmem %s5, %s542
          %s544 = smul.u32 %s44, 2
          %s545 = sadd.s32 %s544, %s45
          %s546 = sld [smem:[#allocation4 + %s545]]
        $region72: #{tpu_custom_call.1} parent=55 // pred_fallthru
          _
        // Predicated region
        $region73: #{tpu_custom_call.1} parent=55 // pred_check
          %p547 = pneg %p185
        $region74: #{tpu_custom_call.1} parent=55 // pred_check_branch
          %549 = sbr.rel (%p547) target = $region76
        $region75: #{tpu_custom_call.1} parent=55 // pred_region
          %p550 = scmp.lt.s32.totalorder %s44, 1
          %s551 = scalar_select %p550, %s44, 1
          %s552 = smul.addr %s551, 8
          %s553 = scalar_lea.vmem %s6, %s552
        $region76: #{tpu_custom_call.1} parent=55 // pred_fallthru
          _
        // Predicated region
        $region77: #{tpu_custom_call.1} parent=55 // pred_check
          %p554 = pneg %p217
        $region78: #{tpu_custom_call.1} parent=55 // pred_check_branch
          %556 = sbr.rel (%p554) target = $region80
        $region79: #{tpu_custom_call.1} parent=55 // pred_region
          %s557 = smul.u32 %s44, 2
          %s558 = sadd.s32 %s557, %s45
          %s559 = sld [smem:[#allocation4 + %s558]]
          %p560 = scmp.lt.s32.totalorder %s559, 1
          %s561 = scalar_select %p560, %s559, 1
          %s562 = smul.addr %s561, 8
          %s563 = scalar_lea.vmem %s7, %s562
          %s564 = smul.u32 %s44, 2
          %s565 = sadd.s32 %s564, %s45
          %s566 = sld [smem:[#allocation4 + %s565]]
        $region80: #{tpu_custom_call.1} parent=55 // pred_fallthru
          _
      $region56: #{tpu_custom_call.1} parent=5 // pred_fallthru
        _
      %p567 = scmp.le.s32.totalorder 1, %s37
      %p568 = scmp.lt.s32.totalorder %s37, 5
      %p569 = pnand %p567, %p568
      %p570 = pneg %p569
      // Predicated region
      $region81: #{tpu_custom_call.1} parent=5 // pred_check
        _
      $region82: #{tpu_custom_call.1} parent=5 // pred_check_branch
        %572 = sbr.rel (%p569) target = $region84
      $region83: #{tpu_custom_call.1} parent=5 // pred_region
        %s573 = ssub.s32 %s37, 1
        %p574 = scmp.lt.s32.totalorder %s46, 1
        %s575 = scalar_select %p574, %s46, 1
        %s576 = smul.addr %s575, 8
        %s577 = scalar_lea.vmem %s2, %s576
        %p578 = pneg %p75
        %p579 = pneg %p72
        %s580 = smul.u32 %s46, 2
        %s581 = sadd.s32 %s580, %s47
        %s582 = sld [smem:[#allocation4 + %s581]]
        %p583 = scmp.lt.s32.totalorder %s582, 1
        %s584 = scalar_select %p583, %s582, 1
        %s585 = smul.addr %s584, 4
        %s586 = scalar_lea.vmem %s3, %s585
        %p587 = pneg %p107
        %p588 = pneg %p104
        %p589 = scmp.lt.s32.totalorder %s46, 1
        %s590 = scalar_select %p589, %s46, 1
        %s591 = smul.addr %s590, 8
        %s592 = scalar_lea.vmem %s4, %s591
        %p593 = pneg %p133
        %p594 = pneg %p130
        %s595 = smul.u32 %s46, 2
        %s596 = sadd.s32 %s595, %s47
        %s597 = sld [smem:[#allocation4 + %s596]]
        %p598 = scmp.lt.s32.totalorder %s597, 1
        %s599 = scalar_select %p598, %s597, 1
        %s600 = scalar_lea.vmem %s5, %s599
        %p601 = pneg %p165
        %p602 = pneg %p162
        %p603 = scmp.lt.s32.totalorder %s46, 1
        %s604 = scalar_select %p603, %s46, 1
        %s605 = smul.addr %s604, 8
        %s606 = scalar_lea.vmem %s6, %s605
        %p607 = pneg %p191
        %p608 = pneg %p188
        %s609 = smul.u32 %s46, 2
        %s610 = sadd.s32 %s609, %s47
        %s611 = sld [smem:[#allocation4 + %s610]]
        %p612 = scmp.lt.s32.totalorder %s611, 1
        %s613 = scalar_select %p612, %s611, 1
        %s614 = smul.addr %s613, 8
        %s615 = scalar_lea.vmem %s7, %s614
        %p616 = pneg %p223
        %p617 = pneg %p220
        %p618 = pneg %p244
        %p619 = pneg %p241
        %p620 = pneg %p265
        %p621 = pneg %p262
        %p622 = pneg %p286
        %p623 = pneg %p283
        %p624 = pneg %p307
        %p625 = pneg %p304
        %p626 = pneg %p328
        %p627 = pneg %p325
        %p628 = pneg %p349
        %p629 = pneg %p346
        %p630 = pneg %p370
        %p631 = pneg %p367
        %p632 = pneg %p391
        %p633 = pneg %p388
        %p634 = pneg %p412
        %p635 = pneg %p409
        %p636 = pneg %p433
        %p637 = pneg %p430
        %p638 = pneg %p459
        %p639 = pneg %p456
        %s640 = sand.u32 %s446, 1
        %s641 = scalar_lea.sflag [#allocation7], %s640
        %s642 = sand.u32 %s446, 1
        %s643 = smul.addr %s642, 8
        %s644 = scalar_lea.vmem [#allocation6], %s643
        %p645 = scmp.lt.s32.totalorder %s46, 1
        %s646 = scalar_select %p645, %s46, 1
        %s647 = smul.addr %s646, 8
        %s648 = scalar_lea.vmem %s2, %s647
        %s649 = smul.u32 %s46, 2
        %s650 = sadd.s32 %s649, %s47
        %s651 = sld [smem:[#allocation4 + %s650]]
        %p652 = scmp.lt.s32.totalorder %s651, 1
        %s653 = scalar_select %p652, %s651, 1
        %s654 = smul.addr %s653, 4
        %s655 = scalar_lea.vmem %s3, %s654
        %s656 = smul.u32 %s46, 2
        %s657 = sadd.s32 %s656, %s47
        %s658 = sld [smem:[#allocation4 + %s657]]
        %p659 = scmp.lt.s32.totalorder %s46, 1
        %s660 = scalar_select %p659, %s46, 1
        %s661 = smul.addr %s660, 8
        %s662 = scalar_lea.vmem %s4, %s661
        %s663 = smul.u32 %s46, 2
        %s664 = sadd.s32 %s663, %s47
        %s665 = sld [smem:[#allocation4 + %s664]]
        %p666 = scmp.lt.s32.totalorder %s665, 1
        %s667 = scalar_select %p666, %s665, 1
        %s668 = scalar_lea.vmem %s5, %s667
        %s669 = smul.u32 %s46, 2
        %s670 = sadd.s32 %s669, %s47
        %s671 = sld [smem:[#allocation4 + %s670]]
        %p672 = scmp.lt.s32.totalorder %s46, 1
        %s673 = scalar_select %p672, %s46, 1
        %s674 = smul.addr %s673, 8
        %s675 = scalar_lea.vmem %s6, %s674
        %s676 = smul.u32 %s46, 2
        %s677 = sadd.s32 %s676, %s47
        %s678 = sld [smem:[#allocation4 + %s677]]
        %p679 = scmp.lt.s32.totalorder %s678, 1
        %s680 = scalar_select %p679, %s678, 1
        %s681 = smul.addr %s680, 8
        %s682 = scalar_lea.vmem %s7, %s681
        %s683 = smul.u32 %s46, 2
        %s684 = sadd.s32 %s683, %s47
        %s685 = sld [smem:[#allocation4 + %s684]]
        %p687 = scmp.eq.s32.totalorder %s47, 0
        // Predicated region
        $region85: #{tpu_custom_call.1} parent=83 // pred_check
          %p688 = pneg %p687
        $region86: #{tpu_custom_call.1} parent=83 // pred_check_branch
          %690 = sbr.rel (%p688) target = $region88
        $region87: #{tpu_custom_call.1} parent=83 // pred_region
          %vm691 = vcmask 261120
          %692 = vst.msk [vmem:[#allocation2] sm:$0xff] %vm691, 0.0
        $region88: #{tpu_custom_call.1} parent=83 // pred_fallthru
          _
        %s693 = smul.u32 %s46, 2
        %s694 = sadd.s32 %s693, %s47
        %s695 = sld [smem:[#allocation5 + %s694]]
        %p696 = scmp.gt.s32.totalorder %s695, 0
        // Predicated region
        $region89: #{tpu_custom_call.1} parent=83 // pred_check
          %p697 = pneg %p696
        $region90: #{tpu_custom_call.1} parent=83 // pred_check_branch
          %699 = sbr.rel (%p697) target = $region92
        $region91: #{tpu_custom_call.1} parent=83 // pred_region
          %v700 = vld [vmem:[%s662] sm:$0xff]
          %v701 = vld [vmem:[%s8] sm:$0x1]
          %s702 = smul.u32 %s46, 8
          %v703 = vlaneseq
          %v704 = vshrl.u32 %v703, 7
          %v705 = vstv %s702
          %v706 = vadd.s32 %v705, %v704
          %v707 = vlaneseq
          %v708 = vand.u32 %v707, 127
          %v709 = vld [vmem:[#allocation2] sm:$0xff]
          %s710 = smul.u32 %s47, 8
          %s711 = sadd.s32 %s710, 0
          %v712 = vld [vmem:[%s655] sm:$0x7]
          %v713 = vld [vmem:[%s668] sm:$0x1]
          %v714 = vld [vmem:[%s648] sm:$0xff]
          %716 = vset.pattern.permute.xlu0 0
          %717 = vperm.xlu0 %716, %v714
          %v718 = vpop.permute.xlu0 %717
          %v720 = vlaneseq
          %v721 = vshrl.u32 %v720, 7
          %v722 = vsub.s32 0, %v721
          %v723 = vrot.slane %v712, %v722
          %v724 = vsub.f32 %v718, %v723
          %v725 = vmul.f32 %v724, %v724
          %v726 = vadd.f32 %v725, 0.0
          %727 = vset.pattern.permute.xlu0 1
          %728 = vperm.xlu0 %727, %v714
          %v729 = vpop.permute.xlu0 %728
          %v731 = vlaneseq
          %v732 = vshrl.u32 %v731, 7
          %v733 = vsub.s32 1, %v732
          %v734 = vrot.slane %v712, %v733
          %v735 = vsub.f32 %v729, %v734
          %v736 = vmul.f32 %v735, %v735
          %v737 = vadd.f32 %v726, %v736
          %738 = vset.pattern.permute.xlu0 2
          %739 = vperm.xlu0 %738, %v714
          %v740 = vpop.permute.xlu0 %739
          %v742 = vlaneseq
          %v743 = vshrl.u32 %v742, 7
          %v744 = vsub.s32 2, %v743
          %v745 = vrot.slane %v712, %v744
          %v746 = vsub.f32 %v740, %v745
          %v747 = vmul.f32 %v746, %v746
          %v748 = vadd.f32 %v737, %v747
          %v749 = vrsqrt.pop %v748
          %v750 = vmul.f32 %v748, %v749
          %vm751 = vcmp.eq.f32.partialorder %v748, inf
          %v752 = vsel %vm751, %v748, %v750
          %vm753 = vcmp.eq.f32.partialorder %v748, 0.0
          %v754 = vand.u32 %v748, 2147483648
          %v755 = vsel %vm753, %v754, %v752
          %756 = vset.pattern.permute.xlu0 0
          %757 = vperm.xlu0 %756, %v700
          %v758 = vpop.permute.xlu0 %757
          %v759 = vlaneseq
          %v760 = vshrl.u32 %v759, 7
          %v761 = vsub.s32 0, %v760
          %v762 = vrot.slane %v713, %v761
          %vm763 = vcmp.eq.s32.totalorder %v758, %v762
          %vm764 = vcmp.lt.f32.partialorder %v755, 5.0
          %vm765 = vmand %vm763, %vm764
          %v766 = vstv %s711
          %v767 = vadd.s32 %v766, %v708
          %vm768 = vcmp.ne.s32.totalorder %v706, %v767
          %vm769 = vmand %vm765, %vm768
          %v770 = vmul.f32 %v755, 0.62831855
          %v771 = vand.u32 2147483647, %v770
          %vm772 = vcmp.le.f32.partialorder %v771, 0.7853982
          %vm773 = vcmp.lt.s32.totalorder %v770, 0
          %v774 = vand.u32 %v770, 2139095040
          %v775 = vshrl.u32 %v774, 23
          %v776 = vsub.s32 %v775, 127
          %v777 = vand.u32 2147483647, %v770
          %v778 = vand.u32 %v777, 8388607
          %v779 = vor.u32 %v778, 8388608
          %v780 = vsub.s32 0, %v779
          %v781 = vadd.s32 %v776, 1
          %vm782 = vcmp.gt.s32.totalorder %v781, 0
          %v783 = vsel %vm782, %v781, 0
          %v784 = vshrl.u32 %v783, 5
          %v785 = vand.u32 %v783, 31
          %v786 = vsub.s32 32, %v785
          %v787 = vshrl.u32 683565275, %v786
          %v788 = vshll.u32 683565275, %v785
          %v789 = vshrl.u32 2475754826, %v786
          %v790 = vor.u32 %v788, %v789
          %v791 = vshll.u32 2475754826, %v785
          %v792 = vshrl.u32 2131351028, %v786
          %v793 = vor.u32 %v791, %v792
          %v794 = vshll.u32 2131351028, %v785
          %v795 = vshrl.u32 2102212464, %v786
          %v796 = vor.u32 %v794, %v795
          %v797 = vshll.u32 2102212464, %v785
          %v798 = vshrl.u32 920167782, %v786
          %v799 = vor.u32 %v797, %v798
          %v800 = vshll.u32 920167782, %v785
          %v801 = vshrl.u32 1326507024, %v786
          %v802 = vor.u32 %v800, %v801
          %vm803 = vcmp.lt.s32.totalorder %v784, 1
          %vm804 = vcmp.lt.s32.totalorder %v784, 2
          %vm805 = vcmp.lt.s32.totalorder %v784, 3
          %vm806 = vcmp.lt.s32.totalorder %v784, 4
          %v807 = vsel %vm803, %v787, %v790
          %v808 = vsel %vm806, %v796, 2102212464
          %v809 = vsel %vm805, %v793, %v808
          %v810 = vsel %vm804, %v807, %v809
          %v811 = vsel %vm803, %v790, %v793
          %v812 = vsel %vm806, %v799, 920167782
          %v813 = vsel %vm805, %v796, %v812
          %v814 = vsel %vm804, %v811, %v813
          %v815 = vsel %vm803, %v793, %v796
          %v816 = vsel %vm806, %v802, 1326507024
          %v817 = vsel %vm805, %v799, %v816
          %v818 = vsel %vm804, %v815, %v817
          %v819 = vshll.u32 %v779, 8
          %v820 = vmul.u32.u64.compose %v819, %v818
          %v821 = vextract.low.u32 %v820
          %v822 = vextract.high.u32 %v820
          %v823 = vmul.u32.u64.compose %v819, %v814
          %v824 = vextract.low.u32 %v823
          %v825 = vextract.high.u32 %v823
          %v826 = vmul.u32 %v819, %v810
          %v827 = vadd.s32 %v822, %v824
          %vm828 = vc.u32 %v822, %v824
          %v829 = vadd.s32 %v825, 1
          %v830 = vsel %vm828, %v829, %v825
          %v831 = vadd.s32 %v826, %v830
          %v832 = vadd.s32 %v831, 536870912
          %v833 = vshrl.u32 %v832, 30
          %v834 = vshll.u32 %v833, 30
          %v835 = vsub.s32 %v831, %v834
          %vm836 = vcmp.lt.s32.totalorder %v835, 0
          %v837 = vsub.s32 0, %v835
          %v838 = vsel %vm836, %v837, %v835
          %v839 = vclz %v838
          %v840 = vsub.s32 %v839, 2
          %vm841 = vcmp.gt.s32.totalorder 0, %v840
          %v842 = vsel %vm841, 0, %v840
          %v843 = vsub.s32 32, %v842
          %v844 = vshll.u32 %v835, %v842
          %v845 = vshrl.u32 %v827, %v843
          %v846 = vor.u32 %v844, %v845
          %v847 = vsub.s32 4294967266, %v842
          %v848 = vadd.s32 %v847, 127
          %v849 = vshll.u32 %v848, 23
          %v850 = vor.u32 4788187, %v849
          %v851 = vand.u32 2147483647, %v850
          %v853 = vcvt.s32.f32 %v846
          %v854 = vmul.f32 %v853, %v851
          %v855 = vxor.u32 %v854, 2147483648
          %v856 = vsel %vm773, %v855, %v854
          %v857 = vsub.s32 4, %v833
          %v858 = vsel %vm773, %v857, %v833
          %v859 = vsel %vm772, %v770, %v856
          %v860 = vsel %vm772, 0, %v858
          %v861 = vcosq.f32.pop %v859
          %v862 = vsinq.f32.pop %v859
          %vm863 = vweird.f32 %v770
          %v864 = vand.u32 %v860, 3
          %vm865 = vcmp.lt.s32.totalorder %v864, 2
          %vm866 = vcmp.eq.s32.totalorder %v864, 0
          %v867 = vxor.u32 %v862, 2147483648
          %v868 = vsel %vm866, %v861, %v867
          %vm869 = vcmp.eq.s32.totalorder %v864, 2
          %v870 = vxor.u32 %v861, 2147483648
          %v871 = vsel %vm869, %v870, %v862
          %v872 = vsel %vm865, %v868, %v871
          %v873 = vsel %vm863, nan, %v872
          %v874 = vadd.f32 %v873, 1.0
          %v875 = vmul.f32 %v874, 0.5
          %v876 = vsel %vm769, 1, 0
          %v877 = vcvt.s32.f32 %v876
          %v878 = vmul.f32 %v875, %v877
          %v879 = vmul.f32 %v755, 6.9296465
          %v880 = vlaneseq
          %v881 = vshrl.u32 %v880, 7
          %v882 = vsub.s32 0, %v881
          %v883 = vrot.slane %v879, %v882
          %885 = vbcast.lane.b32.xlu0 %v883, 256
          %v886 = vpop.permute.xlu0 %885
          %v887 = vlaneseq
          %v888 = vshrl.u32 %v887, 7
          %v889 = vsub.s32 1, %v888
          %v890 = vrot.slane %v879, %v889
          %892 = vbcast.lane.b32.xlu0 %v890, 256
          %v893 = vpop.permute.xlu0 %892
          %v894 = vlaneseq
          %v895 = vshrl.u32 %v894, 7
          %v896 = vsub.s32 2, %v895
          %v897 = vrot.slane %v879, %v896
          %899 = vbcast.lane.b32.xlu0 %v897, 256
          %v900 = vpop.permute.xlu0 %899
          %v901 = vlaneseq
          %v902 = vshrl.u32 %v901, 7
          %v903 = vsub.s32 3, %v902
          %v904 = vrot.slane %v879, %v903
          %906 = vbcast.lane.b32.xlu0 %v904, 256
          %v907 = vpop.permute.xlu0 %906
          %v908 = vlaneseq
          %v909 = vshrl.u32 %v908, 7
          %v910 = vsub.s32 4, %v909
          %v911 = vrot.slane %v879, %v910
          %913 = vbcast.lane.b32.xlu0 %v911, 256
          %v914 = vpop.permute.xlu0 %913
          %v915 = vlaneseq
          %v916 = vshrl.u32 %v915, 7
          %v917 = vsub.s32 5, %v916
          %v918 = vrot.slane %v879, %v917
          %920 = vbcast.lane.b32.xlu0 %v918, 256
          %v921 = vpop.permute.xlu0 %920
          %v922 = vlaneseq
          %v923 = vshrl.u32 %v922, 7
          %v924 = vsub.s32 6, %v923
          %v925 = vrot.slane %v879, %v924
          %927 = vbcast.lane.b32.xlu0 %v925, 256
          %v928 = vpop.permute.xlu0 %927
          %v929 = vlaneseq
          %v930 = vshrl.u32 %v929, 7
          %v931 = vsub.s32 7, %v930
          %v932 = vrot.slane %v879, %v931
          %934 = vbcast.lane.b32.xlu0 %v932, 256
          %v935 = vpop.permute.xlu0 %934
          %v937 = vlaneseq
          %v938 = vshrl.u32 %v937, 7
          %v939 = vsub.s32 0, %v938
          %v940 = vrot.slane %v701, %v939
          %v942 = vsub.f32 %v886, %v940
          %v943 = vsub.f32 %v893, %v940
          %v944 = vsub.f32 %v900, %v940
          %v945 = vsub.f32 %v907, %v940
          %v946 = vsub.f32 %v914, %v940
          %v947 = vsub.f32 %v921, %v940
          %v948 = vsub.f32 %v928, %v940
          %v949 = vsub.f32 %v935, %v940
          %v950 = vmul.f32 %v942, %v942
          %v951 = vmul.f32 %v943, %v943
          %v952 = vmul.f32 %v944, %v944
          %v953 = vmul.f32 %v945, %v945
          %v954 = vmul.f32 %v946, %v946
          %v955 = vmul.f32 %v947, %v947
          %v956 = vmul.f32 %v948, %v948
          %v957 = vmul.f32 %v949, %v949
          %v958 = vsub.f32 0.0, %v950
          %v959 = vsub.f32 0.0, %v951
          %v960 = vsub.f32 0.0, %v952
          %v961 = vsub.f32 0.0, %v953
          %v962 = vsub.f32 0.0, %v954
          %v963 = vsub.f32 0.0, %v955
          %v964 = vsub.f32 0.0, %v956
          %v965 = vsub.f32 0.0, %v957
          %v966 = vmul.f32 %v958, 1.442695
          %v967 = vpow.pop %v966
          %v968 = vmul.f32 %v959, 1.442695
          %v969 = vpow.pop %v968
          %v970 = vmul.f32 %v960, 1.442695
          %v971 = vpow.pop %v970
          %v972 = vmul.f32 %v961, 1.442695
          %v973 = vpow.pop %v972
          %v974 = vmul.f32 %v962, 1.442695
          %v975 = vpow.pop %v974
          %v976 = vmul.f32 %v963, 1.442695
          %v977 = vpow.pop %v976
          %v978 = vmul.f32 %v964, 1.442695
          %v979 = vpow.pop %v978
          %v980 = vmul.f32 %v965, 1.442695
          %v981 = vpow.pop %v980
          %v982 = vpack.c.bf16 %v969, %v967
          %v983 = vpack.c.bf16 %v973, %v971
          %v984 = vpack.c.bf16 %v977, %v975
          %v985 = vpack.c.bf16 %v981, %v979
          %v986 = vld [vmem:[%s9] sm:$0xf]
          %v987 = vld [vmem:[%s9 + $0x4] sm:$0xf]
          %v988 = vld [vmem:[%s9 + $0x8] sm:$0xf]
          %v989 = vld [vmem:[%s9 + $0xc] sm:$0xf]
          %v990 = vld [vmem:[%s9 + $0x10] sm:$0xf]
          %v991 = vld [vmem:[%s9 + $0x14] sm:$0xf]
          %v992 = vld [vmem:[%s9 + $0x18] sm:$0xf]
          %v993 = vld [vmem:[%s9 + $0x1c] sm:$0xf]
          %v994 = vld [vmem:[%s9 + $0x20] sm:$0xf]
          %v995 = vld [vmem:[%s9 + $0x24] sm:$0xf]
          %v996 = vld [vmem:[%s9 + $0x28] sm:$0xf]
          %v997 = vld [vmem:[%s9 + $0x2c] sm:$0xf]
          %v998 = vld [vmem:[%s9 + $0x30] sm:$0xf]
          %v999 = vld [vmem:[%s9 + $0x34] sm:$0xf]
          %v1000 = vld [vmem:[%s9 + $0x38] sm:$0xf]
          %v1001 = vld [vmem:[%s9 + $0x3c] sm:$0xf]
          %v1002 = vld [vmem:[%s10] sm:$0x1]
          %v1004 = vlaneseq
          %v1005 = vshrl.u32 %v1004, 7
          %v1006 = vsub.s32 0, %v1005
          %v1007 = vrot.slane %v1002, %v1006
          %v1025 = vunpack.c.l.b16 %v986
          %v1026 = vunpack.c.l.b16 %v987
          %v1027 = vunpack.c.l.b16 %v988
          %v1028 = vunpack.c.l.b16 %v989
          %v1029 = vunpack.c.l.b16 %v990
          %v1030 = vunpack.c.l.b16 %v991
          %v1031 = vunpack.c.l.b16 %v992
          %v1032 = vunpack.c.l.b16 %v993
          %v1033 = vunpack.c.l.b16 %v994
          %v1034 = vunpack.c.l.b16 %v995
          %v1035 = vunpack.c.l.b16 %v996
          %v1036 = vunpack.c.l.b16 %v997
          %v1037 = vunpack.c.l.b16 %v998
          %v1038 = vunpack.c.l.b16 %v999
          %v1039 = vunpack.c.l.b16 %v1000
          %v1040 = vunpack.c.l.b16 %v1001
          %v1041 = vpack.c.b16 %v1026, %v1025
          %v1042 = vpack.c.b16 %v1028, %v1027
          %v1043 = vpack.c.b16 %v1030, %v1029
          %v1044 = vpack.c.b16 %v1032, %v1031
          %v1045 = vpack.c.b16 %v1034, %v1033
          %v1046 = vpack.c.b16 %v1036, %v1035
          %v1047 = vpack.c.b16 %v1038, %v1037
          %v1048 = vpack.c.b16 %v1040, %v1039
          %1057 = vmatprep.subr.bf16.mxu0 0
          %1058 = vmatpush1.bf16.msra.mxu0 %v1048
          %1059 = vmatprep.subr.bf16.mxu0 0
          %1060 = vmatpush1.bf16.msra.mxu0 %v1047
          %1061 = vmatprep.subr.bf16.mxu0 0
          %1062 = vmatpush1.bf16.msra.mxu0 %v1046
          %1063 = vmatprep.subr.bf16.mxu0 0
          %1064 = vmatpush1.bf16.msra.mxu0 %v1045
          %1065 = vmatprep.subr.bf16.mxu0 0
          %1066 = vmatpush1.bf16.msra.mxu0 %v1044
          %1067 = vmatprep.subr.bf16.mxu0 0
          %1068 = vmatpush1.bf16.msra.mxu0 %v1043
          %1069 = vmatprep.subr.bf16.mxu0 0
          %1070 = vmatpush1.bf16.msra.mxu0 %v1042
          %1071 = vmatprep.subr.bf16.mxu0 0
          %1072 = vmatpush1.bf16.msra.mxu0 %v1041
          %1073 = vmatprep.subr.bf16.mxu0 0
          %1074 = vmatpush2.bf16.msra.mxu0 0
          %1075 = vmatprep.subr.bf16.mxu0 0
          %1076 = vmatpush2.bf16.msra.mxu0 0
          %1077 = vmatprep.subr.bf16.mxu0 0
          %1078 = vmatpush2.bf16.msra.mxu0 0
          %1079 = vmatprep.subr.bf16.mxu0 0
          %1080 = vmatpush2.bf16.msra.mxu0 0
          %1081 = vmatprep.subr.bf16.mxu0 0
          %1082 = vmatpush2.bf16.msra.mxu0 0
          %1083 = vmatprep.subr.bf16.mxu0 0
          %1084 = vmatpush2.bf16.msra.mxu0 0
          %1085 = vmatprep.subr.bf16.mxu0 0
          %1086 = vmatpush2.bf16.msra.mxu0 0
          %1087 = vmatprep.subr.bf16.mxu0 0
          %1088 = vmatpush2.bf16.msra.mxu0 0
          %1089 = vmatprep.mubr.bf16.mxu0 0
          %1090 = vmatmul.mubr.bf16.gmra.mxu0 %v982
          %v1091 = vpop.f32.mrf.mxu0
          %v1092 = vadd.f32 %v1007, %v1091
          %v1093 = vpop.f32.mrf.mxu0
          %v1094 = vpop.f32.mrf.mxu0
          %v1095 = vadd.f32 %v1007, %v1094
          %v1096 = vpop.f32.mrf.mxu0
          %1097 = vmatprep.mubr.bf16.mxu0 0
          %1098 = vmatmul.mubr.bf16.gmra.mxu0 %v983
          %v1099 = vpop.f32.mrf.mxu0
          %v1100 = vadd.f32 %v1007, %v1099
          %v1101 = vpop.f32.mrf.mxu0
          %v1102 = vpop.f32.mrf.mxu0
          %v1103 = vadd.f32 %v1007, %v1102
          %v1104 = vpop.f32.mrf.mxu0
          %1105 = vmatprep.mubr.bf16.mxu0 0
          %1106 = vmatmul.mubr.bf16.gmra.mxu0 %v984
          %v1107 = vpop.f32.mrf.mxu0
          %v1108 = vadd.f32 %v1007, %v1107
          %v1109 = vpop.f32.mrf.mxu0
          %v1110 = vpop.f32.mrf.mxu0
          %v1111 = vadd.f32 %v1007, %v1110
          %v1112 = vpop.f32.mrf.mxu0
          %1113 = vmatprep.mubr.bf16.mxu0 0
          %1114 = vmatmul.mubr.bf16.gmra.mxu0 %v985
          %v1115 = vpop.f32.mrf.mxu0
          %v1116 = vadd.f32 %v1007, %v1115
          %v1117 = vpop.f32.mrf.mxu0
          %v1118 = vpop.f32.mrf.mxu0
          %v1119 = vadd.f32 %v1007, %v1118
          %v1120 = vpop.f32.mrf.mxu0
          %1121 = vdwg.mxu0
          %v1122 = vmax.f32 %v1092, 0.0
          %v1123 = vmax.f32 %v1095, 0.0
          %v1124 = vmax.f32 %v1100, 0.0
          %v1125 = vmax.f32 %v1103, 0.0
          %v1126 = vmax.f32 %v1108, 0.0
          %v1127 = vmax.f32 %v1111, 0.0
          %v1128 = vmax.f32 %v1116, 0.0
          %v1129 = vmax.f32 %v1119, 0.0
          %v1130 = vand.u32 2147483647, %v1092
          %v1131 = vand.u32 2147483647, %v1095
          %v1132 = vand.u32 2147483647, %v1100
          %v1133 = vand.u32 2147483647, %v1103
          %v1134 = vand.u32 2147483647, %v1108
          %v1135 = vand.u32 2147483647, %v1111
          %v1136 = vand.u32 2147483647, %v1116
          %v1137 = vand.u32 2147483647, %v1119
          %v1138 = vsub.f32 0.0, %v1130
          %v1139 = vsub.f32 0.0, %v1131
          %v1140 = vsub.f32 0.0, %v1132
          %v1141 = vsub.f32 0.0, %v1133
          %v1142 = vsub.f32 0.0, %v1134
          %v1143 = vsub.f32 0.0, %v1135
          %v1144 = vsub.f32 0.0, %v1136
          %v1145 = vsub.f32 0.0, %v1137
          %v1146 = vmul.f32 %v1138, 1.442695
          %v1147 = vpow.pop %v1146
          %v1148 = vmul.f32 %v1139, 1.442695
          %v1149 = vpow.pop %v1148
          %v1150 = vmul.f32 %v1140, 1.442695
          %v1151 = vpow.pop %v1150
          %v1152 = vmul.f32 %v1141, 1.442695
          %v1153 = vpow.pop %v1152
          %v1154 = vmul.f32 %v1142, 1.442695
          %v1155 = vpow.pop %v1154
          %v1156 = vmul.f32 %v1143, 1.442695
          %v1157 = vpow.pop %v1156
          %v1158 = vmul.f32 %v1144, 1.442695
          %v1159 = vpow.pop %v1158
          %v1160 = vmul.f32 %v1145, 1.442695
          %v1161 = vpow.pop %v1160
          %v1162 = vadd.f32 %v1147, 1.0
          %v1163 = vadd.f32 %v1149, 1.0
          %v1164 = vadd.f32 %v1151, 1.0
          %v1165 = vadd.f32 %v1153, 1.0
          %v1166 = vadd.f32 %v1155, 1.0
          %v1167 = vadd.f32 %v1157, 1.0
          %v1168 = vadd.f32 %v1159, 1.0
          %v1169 = vadd.f32 %v1161, 1.0
          %v1170 = vlog2.pop %v1162
          %v1171 = vmul.f32 %v1170, 0.6931472
          %v1172 = vlog2.pop %v1163
          %v1173 = vmul.f32 %v1172, 0.6931472
          %v1174 = vlog2.pop %v1164
          %v1175 = vmul.f32 %v1174, 0.6931472
          %v1176 = vlog2.pop %v1165
          %v1177 = vmul.f32 %v1176, 0.6931472
          %v1178 = vlog2.pop %v1166
          %v1179 = vmul.f32 %v1178, 0.6931472
          %v1180 = vlog2.pop %v1167
          %v1181 = vmul.f32 %v1180, 0.6931472
          %v1182 = vlog2.pop %v1168
          %v1183 = vmul.f32 %v1182, 0.6931472
          %v1184 = vlog2.pop %v1169
          %v1185 = vmul.f32 %v1184, 0.6931472
          %v1186 = vadd.f32 %v1122, %v1171
          %v1187 = vadd.f32 %v1123, %v1173
          %v1188 = vadd.f32 %v1124, %v1175
          %v1189 = vadd.f32 %v1125, %v1177
          %v1190 = vadd.f32 %v1126, %v1179
          %v1191 = vadd.f32 %v1127, %v1181
          %v1192 = vadd.f32 %v1128, %v1183
          %v1193 = vadd.f32 %v1129, %v1185
          %v1194 = vsub.f32 %v1186, 0.6931472
          %v1195 = vsub.f32 %v1187, 0.6931472
          %v1196 = vsub.f32 %v1188, 0.6931472
          %v1197 = vsub.f32 %v1189, 0.6931472
          %v1198 = vsub.f32 %v1190, 0.6931472
          %v1199 = vsub.f32 %v1191, 0.6931472
          %v1200 = vsub.f32 %v1192, 0.6931472
          %v1201 = vsub.f32 %v1193, 0.6931472
          %v1202 = vpack.c.bf16 %v1195, %v1194
          %v1203 = vpack.c.bf16 %v1197, %v1196
          %v1204 = vpack.c.bf16 %v1199, %v1198
          %v1205 = vpack.c.bf16 %v1201, %v1200
          %v1206 = vld [vmem:[%s11] sm:$0xf]
          %v1207 = vld [vmem:[%s11 + $0x4] sm:$0xf]
          %v1208 = vld [vmem:[%s11 + $0x8] sm:$0xf]
          %v1209 = vld [vmem:[%s11 + $0xc] sm:$0xf]
          %v1210 = vld [vmem:[%s12] sm:$0x1]
          %v1212 = vlaneseq
          %v1213 = vshrl.u32 %v1212, 7
          %v1214 = vsub.s32 0, %v1213
          %v1215 = vrot.slane %v1210, %v1214
          %v1221 = vunpack.c.l.b16 %v1206
          %v1222 = vunpack.c.l.b16 %v1207
          %v1223 = vunpack.c.l.b16 %v1208
          %v1224 = vunpack.c.l.b16 %v1209
          %v1225 = vpack.c.b16 %v1222, %v1221
          %v1226 = vpack.c.b16 %v1224, %v1223
          %vm1229 = vcmask 261120
          %v1231 = vsel %vm1229, %v1202, 0
          %v1234 = vsel %vm1229, %v1203, 0
          %v1237 = vsel %vm1229, %v1204, 0
          %v1240 = vsel %vm1229, %v1205, 0
          %1242 = vmatprep.subr.bf16.mxu0 0
          %1243 = vmatpush1.bf16.msra.mxu0 0
          %1244 = vmatprep.subr.bf16.mxu0 0
          %1245 = vmatpush1.bf16.msra.mxu0 0
          %1246 = vmatprep.subr.bf16.mxu0 0
          %1247 = vmatpush1.bf16.msra.mxu0 0
          %1248 = vmatprep.subr.bf16.mxu0 0
          %1249 = vmatpush1.bf16.msra.mxu0 0
          %1250 = vmatprep.subr.bf16.mxu0 0
          %1251 = vmatpush1.bf16.msra.mxu0 0
          %1252 = vmatprep.subr.bf16.mxu0 0
          %1253 = vmatpush1.bf16.msra.mxu0 0
          %1254 = vmatprep.subr.bf16.mxu0 0
          %1255 = vmatpush1.bf16.msra.mxu0 %v1226
          %1256 = vmatprep.subr.bf16.mxu0 0
          %1257 = vmatpush1.bf16.msra.mxu0 %v1225
          %1258 = vmatprep.subr.bf16.mxu0 0
          %1259 = vmatpush2.bf16.msra.mxu0 0
          %1260 = vmatprep.subr.bf16.mxu0 0
          %1261 = vmatpush2.bf16.msra.mxu0 0
          %1262 = vmatprep.subr.bf16.mxu0 0
          %1263 = vmatpush2.bf16.msra.mxu0 0
          %1264 = vmatprep.subr.bf16.mxu0 0
          %1265 = vmatpush2.bf16.msra.mxu0 0
          %1266 = vmatprep.subr.bf16.mxu0 0
          %1267 = vmatpush2.bf16.msra.mxu0 0
          %1268 = vmatprep.subr.bf16.mxu0 0
          %1269 = vmatpush2.bf16.msra.mxu0 0
          %1270 = vmatprep.subr.bf16.mxu0 0
          %1271 = vmatpush2.bf16.msra.mxu0 0
          %1272 = vmatprep.subr.bf16.mxu0 0
          %1273 = vmatpush2.bf16.msra.mxu0 0
          %1274 = vmatprep.mubr.bf16.mxu0 0
          %1275 = vmatmul.mubr.bf16.gmra.mxu0 %v1231
          %v1276 = vpop.f32.mrf.mxu0
          %v1277 = vadd.f32 %v1215, %v1276
          %v1278 = vpop.f32.mrf.mxu0
          %v1279 = vpop.f32.mrf.mxu0
          %v1280 = vadd.f32 %v1215, %v1279
          %v1281 = vpop.f32.mrf.mxu0
          %1282 = vmatprep.mubr.bf16.mxu0 0
          %1283 = vmatmul.mubr.bf16.gmra.mxu0 %v1234
          %v1284 = vpop.f32.mrf.mxu0
          %v1285 = vadd.f32 %v1215, %v1284
          %v1286 = vpop.f32.mrf.mxu0
          %v1287 = vpop.f32.mrf.mxu0
          %v1288 = vadd.f32 %v1215, %v1287
          %v1289 = vpop.f32.mrf.mxu0
          %1290 = vmatprep.mubr.bf16.mxu0 0
          %1291 = vmatmul.mubr.bf16.gmra.mxu0 %v1237
          %v1292 = vpop.f32.mrf.mxu0
          %v1293 = vadd.f32 %v1215, %v1292
          %v1294 = vpop.f32.mrf.mxu0
          %v1295 = vpop.f32.mrf.mxu0
          %v1296 = vadd.f32 %v1215, %v1295
          %v1297 = vpop.f32.mrf.mxu0
          %1298 = vmatprep.mubr.bf16.mxu0 0
          %1299 = vmatmul.mubr.bf16.gmra.mxu0 %v1240
          %v1300 = vpop.f32.mrf.mxu0
          %v1301 = vadd.f32 %v1215, %v1300
          %v1302 = vpop.f32.mrf.mxu0
          %v1303 = vpop.f32.mrf.mxu0
          %v1304 = vadd.f32 %v1215, %v1303
          %v1305 = vpop.f32.mrf.mxu0
          %1306 = vdwg.mxu0
          %v1307 = vld [vmem:[%s682] sm:$0xff]
          %v1308 = vpack.c.bf16 %v1307, %v1307
          %v1309 = vld [vmem:[%s13] sm:$0xf]
          %v1310 = vld [vmem:[%s13 + $0x4] sm:$0xf]
          %v1311 = vld [vmem:[%s13 + $0x8] sm:$0xf]
          %v1312 = vld [vmem:[%s13 + $0xc] sm:$0xf]
          %v1317 = vunpack.c.l.b16 %v1309
          %v1318 = vunpack.c.l.b16 %v1310
          %v1319 = vunpack.c.l.b16 %v1311
          %v1320 = vunpack.c.l.b16 %v1312
          %v1321 = vpack.c.b16 %v1318, %v1317
          %v1322 = vpack.c.b16 %v1320, %v1319
          %v1326 = vsel %vm1229, %v1308, 0
          %1328 = vmatprep.subr.bf16.mxu0 0
          %1329 = vmatpush1.bf16.msra.mxu0 0
          %1330 = vmatprep.subr.bf16.mxu0 0
          %1331 = vmatpush1.bf16.msra.mxu0 0
          %1332 = vmatprep.subr.bf16.mxu0 0
          %1333 = vmatpush1.bf16.msra.mxu0 0
          %1334 = vmatprep.subr.bf16.mxu0 0
          %1335 = vmatpush1.bf16.msra.mxu0 0
          %1336 = vmatprep.subr.bf16.mxu0 0
          %1337 = vmatpush1.bf16.msra.mxu0 0
          %1338 = vmatprep.subr.bf16.mxu0 0
          %1339 = vmatpush1.bf16.msra.mxu0 0
          %1340 = vmatprep.subr.bf16.mxu0 0
          %1341 = vmatpush1.bf16.msra.mxu0 %v1322
          %1342 = vmatprep.subr.bf16.mxu0 0
          %1343 = vmatpush1.bf16.msra.mxu0 %v1321
          %1344 = vmatprep.subr.bf16.mxu0 0
          %1345 = vmatpush2.bf16.msra.mxu0 0
          %1346 = vmatprep.subr.bf16.mxu0 0
          %1347 = vmatpush2.bf16.msra.mxu0 0
          %1348 = vmatprep.subr.bf16.mxu0 0
          %1349 = vmatpush2.bf16.msra.mxu0 0
          %1350 = vmatprep.subr.bf16.mxu0 0
          %1351 = vmatpush2.bf16.msra.mxu0 0
          %1352 = vmatprep.subr.bf16.mxu0 0
          %1353 = vmatpush2.bf16.msra.mxu0 0
          %1354 = vmatprep.subr.bf16.mxu0 0
          %1355 = vmatpush2.bf16.msra.mxu0 0
          %1356 = vmatprep.subr.bf16.mxu0 0
          %1357 = vmatpush2.bf16.msra.mxu0 0
          %1358 = vmatprep.subr.bf16.mxu0 0
          %1359 = vmatpush2.bf16.msra.mxu0 0
          %1360 = vmatprep.mubr.bf16.mxu0 0
          %1361 = vmatmul.mubr.bf16.gmra.mxu0 %v1326
          %v1362 = vpop.f32.mrf.mxu0
          %v1363 = vadd.f32 0.0, %v1362
          %v1364 = vpop.f32.mrf.mxu0
          %v1365 = vpop.f32.mrf.mxu0
          %v1366 = vpop.f32.mrf.mxu0
          %1367 = vdwg.mxu0
          %v1368 = vlaneseq
          %v1369 = vshrl.u32 %v1368, 7
          %v1370 = vsub.s32 0, %v1369
          %v1371 = vrot.slane %v878, %v1370
          %1373 = vbcast.lane.b32.xlu0 %v1371, 256
          %v1374 = vpop.permute.xlu0 %1373
          %v1375 = vlaneseq
          %v1376 = vshrl.u32 %v1375, 7
          %v1377 = vsub.s32 1, %v1376
          %v1378 = vrot.slane %v878, %v1377
          %1380 = vbcast.lane.b32.xlu0 %v1378, 256
          %v1381 = vpop.permute.xlu0 %1380
          %v1382 = vlaneseq
          %v1383 = vshrl.u32 %v1382, 7
          %v1384 = vsub.s32 2, %v1383
          %v1385 = vrot.slane %v878, %v1384
          %1387 = vbcast.lane.b32.xlu0 %v1385, 256
          %v1388 = vpop.permute.xlu0 %1387
          %v1389 = vlaneseq
          %v1390 = vshrl.u32 %v1389, 7
          %v1391 = vsub.s32 3, %v1390
          %v1392 = vrot.slane %v878, %v1391
          %1394 = vbcast.lane.b32.xlu0 %v1392, 256
          %v1395 = vpop.permute.xlu0 %1394
          %v1396 = vlaneseq
          %v1397 = vshrl.u32 %v1396, 7
          %v1398 = vsub.s32 4, %v1397
          %v1399 = vrot.slane %v878, %v1398
          %1401 = vbcast.lane.b32.xlu0 %v1399, 256
          %v1402 = vpop.permute.xlu0 %1401
          %v1403 = vlaneseq
          %v1404 = vshrl.u32 %v1403, 7
          %v1405 = vsub.s32 5, %v1404
          %v1406 = vrot.slane %v878, %v1405
          %1408 = vbcast.lane.b32.xlu0 %v1406, 256
          %v1409 = vpop.permute.xlu0 %1408
          %v1410 = vlaneseq
          %v1411 = vshrl.u32 %v1410, 7
          %v1412 = vsub.s32 6, %v1411
          %v1413 = vrot.slane %v878, %v1412
          %1415 = vbcast.lane.b32.xlu0 %v1413, 256
          %v1416 = vpop.permute.xlu0 %1415
          %v1417 = vlaneseq
          %v1418 = vshrl.u32 %v1417, 7
          %v1419 = vsub.s32 7, %v1418
          %v1420 = vrot.slane %v878, %v1419
          %1422 = vbcast.lane.b32.xlu0 %v1420, 256
          %v1423 = vpop.permute.xlu0 %1422
          %v1424 = vmul.f32 %v1277, %v1374
          %v1425 = vmul.f32 %v1280, %v1381
          %v1426 = vmul.f32 %v1285, %v1388
          %v1427 = vmul.f32 %v1288, %v1395
          %v1428 = vmul.f32 %v1293, %v1402
          %v1429 = vmul.f32 %v1296, %v1409
          %v1430 = vmul.f32 %v1301, %v1416
          %v1431 = vmul.f32 %v1304, %v1423
          %v1432 = vmul.f32 %v1424, %v1363
          %v1433 = vmul.f32 %v1425, %v1363
          %v1434 = vmul.f32 %v1426, %v1363
          %v1435 = vmul.f32 %v1427, %v1363
          %v1436 = vmul.f32 %v1428, %v1363
          %v1437 = vmul.f32 %v1429, %v1363
          %v1438 = vmul.f32 %v1430, %v1363
          %v1439 = vmul.f32 %v1431, %v1363
          %v1440 = vsel %vm1229, %v1432, 0.0
          %v1441 = vrot.slane %v1440, 4
          %v1442 = vadd.f32 %v1440, %v1441
          %v1443 = vrot.slane %v1442, 2
          %v1444 = vadd.f32 %v1442, %v1443
          %v1445 = vrot.slane %v1444, 1
          %v1446 = vadd.f32 %v1444, %v1445
          %v1447 = vsel %vm1229, %v1433, 0.0
          %v1448 = vrot.slane %v1447, 4
          %v1449 = vadd.f32 %v1447, %v1448
          %v1450 = vrot.slane %v1449, 2
          %v1451 = vadd.f32 %v1449, %v1450
          %v1452 = vrot.slane %v1451, 1
          %v1453 = vadd.f32 %v1451, %v1452
          %v1454 = vsel %vm1229, %v1434, 0.0
          %v1455 = vrot.slane %v1454, 4
          %v1456 = vadd.f32 %v1454, %v1455
          %v1457 = vrot.slane %v1456, 2
          %v1458 = vadd.f32 %v1456, %v1457
          %v1459 = vrot.slane %v1458, 1
          %v1460 = vadd.f32 %v1458, %v1459
          %v1461 = vsel %vm1229, %v1435, 0.0
          %v1462 = vrot.slane %v1461, 4
          %v1463 = vadd.f32 %v1461, %v1462
          %v1464 = vrot.slane %v1463, 2
          %v1465 = vadd.f32 %v1463, %v1464
          %v1466 = vrot.slane %v1465, 1
          %v1467 = vadd.f32 %v1465, %v1466
          %v1468 = vsel %vm1229, %v1436, 0.0
          %v1469 = vrot.slane %v1468, 4
          %v1470 = vadd.f32 %v1468, %v1469
          %v1471 = vrot.slane %v1470, 2
          %v1472 = vadd.f32 %v1470, %v1471
          %v1473 = vrot.slane %v1472, 1
          %v1474 = vadd.f32 %v1472, %v1473
          %v1475 = vsel %vm1229, %v1437, 0.0
          %v1476 = vrot.slane %v1475, 4
          %v1477 = vadd.f32 %v1475, %v1476
          %v1478 = vrot.slane %v1477, 2
          %v1479 = vadd.f32 %v1477, %v1478
          %v1480 = vrot.slane %v1479, 1
          %v1481 = vadd.f32 %v1479, %v1480
          %v1482 = vsel %vm1229, %v1438, 0.0
          %v1483 = vrot.slane %v1482, 4
          %v1484 = vadd.f32 %v1482, %v1483
          %v1485 = vrot.slane %v1484, 2
          %v1486 = vadd.f32 %v1484, %v1485
          %v1487 = vrot.slane %v1486, 1
          %v1488 = vadd.f32 %v1486, %v1487
          %v1489 = vsel %vm1229, %v1439, 0.0
          %v1490 = vrot.slane %v1489, 4
          %v1491 = vadd.f32 %v1489, %v1490
          %v1492 = vrot.slane %v1491, 2
          %v1493 = vadd.f32 %v1491, %v1492
          %v1494 = vrot.slane %v1493, 1
          %v1495 = vadd.f32 %v1493, %v1494
          %v1496 = vadd.f32 %v1446, 0.0
          %v1497 = vadd.f32 %v1453, 0.0
          %v1498 = vadd.f32 %v1460, 0.0
          %v1499 = vadd.f32 %v1467, 0.0
          %v1500 = vadd.f32 %v1474, 0.0
          %v1501 = vadd.f32 %v1481, 0.0
          %v1502 = vadd.f32 %v1488, 0.0
          %v1503 = vadd.f32 %v1495, 0.0
          %vm1512 = vcmask 1041409
          %v1513 = vsel %vm1512, %v1497, %v1496
          %vm1514 = vcmask 1042434
          %v1515 = vsel %vm1514, %v1498, %v1513
          %vm1516 = vcmask 1043459
          %v1517 = vsel %vm1516, %v1499, %v1515
          %vm1518 = vcmask 1044484
          %v1519 = vsel %vm1518, %v1500, %v1517
          %vm1520 = vcmask 1045509
          %v1521 = vsel %vm1520, %v1501, %v1519
          %vm1522 = vcmask 1046534
          %v1523 = vsel %vm1522, %v1502, %v1521
          %vm1524 = vcmask 1047559
          %v1525 = vsel %vm1524, %v1503, %v1523
          %v1527 = vadd.f32 %v709, %v1525
          %1528 = vst.msk [vmem:[#allocation2] sm:$0xff] %vm1229, %v1527
        $region92: #{tpu_custom_call.1} parent=83 // pred_fallthru
          _
        %p1529 = scmp.eq.s32.totalorder %s47, 1
        // Predicated region
        $region93: #{tpu_custom_call.1} parent=83 // pred_check
          %p1530 = pneg %p1529
        $region94: #{tpu_custom_call.1} parent=83 // pred_check_branch
          %1532 = sbr.rel (%p1530) target = $region96
        $region95: #{tpu_custom_call.1} parent=83 // pred_region
          %v1533 = vld [vmem:[#allocation2] sm:$0xff]
          %v1534 = vpack.c.bf16 %v1533, %v1533
          %v1535 = vld [vmem:[%s14] sm:$0xf]
          %v1536 = vld [vmem:[%s14 + $0x4] sm:$0xf]
          %v1537 = vld [vmem:[%s14 + $0x8] sm:$0xf]
          %v1538 = vld [vmem:[%s14 + $0xc] sm:$0xf]
          %v1539 = vld [vmem:[%s15] sm:$0x1]
          %v1541 = vlaneseq
          %v1542 = vshrl.u32 %v1541, 7
          %v1543 = vsub.s32 0, %v1542
          %v1544 = vrot.slane %v1539, %v1543
          %v1550 = vunpack.c.l.b16 %v1535
          %v1551 = vunpack.c.l.b16 %v1536
          %v1552 = vunpack.c.l.b16 %v1537
          %v1553 = vunpack.c.l.b16 %v1538
          %v1554 = vpack.c.b16 %v1551, %v1550
          %v1555 = vpack.c.b16 %v1553, %v1552
          %vm1558 = vcmask 261120
          %v1560 = vsel %vm1558, %v1534, 0
          %1562 = vmatprep.subr.bf16.mxu0 0
          %1563 = vmatpush1.bf16.msra.mxu0 0
          %1564 = vmatprep.subr.bf16.mxu0 0
          %1565 = vmatpush1.bf16.msra.mxu0 0
          %1566 = vmatprep.subr.bf16.mxu0 0
          %1567 = vmatpush1.bf16.msra.mxu0 0
          %1568 = vmatprep.subr.bf16.mxu0 0
          %1569 = vmatpush1.bf16.msra.mxu0 0
          %1570 = vmatprep.subr.bf16.mxu0 0
          %1571 = vmatpush1.bf16.msra.mxu0 0
          %1572 = vmatprep.subr.bf16.mxu0 0
          %1573 = vmatpush1.bf16.msra.mxu0 0
          %1574 = vmatprep.subr.bf16.mxu0 0
          %1575 = vmatpush1.bf16.msra.mxu0 %v1555
          %1576 = vmatprep.subr.bf16.mxu0 0
          %1577 = vmatpush1.bf16.msra.mxu0 %v1554
          %1578 = vmatprep.subr.bf16.mxu0 0
          %1579 = vmatpush2.bf16.msra.mxu0 0
          %1580 = vmatprep.subr.bf16.mxu0 0
          %1581 = vmatpush2.bf16.msra.mxu0 0
          %1582 = vmatprep.subr.bf16.mxu0 0
          %1583 = vmatpush2.bf16.msra.mxu0 0
          %1584 = vmatprep.subr.bf16.mxu0 0
          %1585 = vmatpush2.bf16.msra.mxu0 0
          %1586 = vmatprep.subr.bf16.mxu0 0
          %1587 = vmatpush2.bf16.msra.mxu0 0
          %1588 = vmatprep.subr.bf16.mxu0 0
          %1589 = vmatpush2.bf16.msra.mxu0 0
          %1590 = vmatprep.subr.bf16.mxu0 0
          %1591 = vmatpush2.bf16.msra.mxu0 0
          %1592 = vmatprep.subr.bf16.mxu0 0
          %1593 = vmatpush2.bf16.msra.mxu0 0
          %1594 = vmatprep.mubr.bf16.mxu0 0
          %1595 = vmatmul.mubr.bf16.gmra.mxu0 %v1560
          %v1596 = vpop.f32.mrf.mxu0
          %v1597 = vadd.f32 %v1544, %v1596
          %v1598 = vpop.f32.mrf.mxu0
          %v1599 = vpop.f32.mrf.mxu0
          %v1600 = vpop.f32.mrf.mxu0
          %1601 = vdwg.mxu0
          %v1602 = vmax.f32 %v1597, 0.0
          %v1603 = vand.u32 2147483647, %v1597
          %v1604 = vsub.f32 0.0, %v1603
          %v1605 = vmul.f32 %v1604, 1.442695
          %v1606 = vpow.pop %v1605
          %v1607 = vadd.f32 %v1606, 1.0
          %v1608 = vlog2.pop %v1607
          %v1609 = vmul.f32 %v1608, 0.6931472
          %v1610 = vadd.f32 %v1602, %v1609
          %v1611 = vsub.f32 %v1610, 0.6931472
          %v1612 = vpack.c.bf16 %v1611, %v1611
          %v1613 = vld [vmem:[%s16] sm:$0xf]
          %v1614 = vld [vmem:[%s16 + $0x4] sm:$0xf]
          %v1615 = vld [vmem:[%s16 + $0x8] sm:$0xf]
          %v1616 = vld [vmem:[%s16 + $0xc] sm:$0xf]
          %v1617 = vld [vmem:[%s17] sm:$0x1]
          %v1619 = vlaneseq
          %v1620 = vshrl.u32 %v1619, 7
          %v1621 = vsub.s32 0, %v1620
          %v1622 = vrot.slane %v1617, %v1621
          %v1628 = vunpack.c.l.b16 %v1613
          %v1629 = vunpack.c.l.b16 %v1614
          %v1630 = vunpack.c.l.b16 %v1615
          %v1631 = vunpack.c.l.b16 %v1616
          %v1632 = vpack.c.b16 %v1629, %v1628
          %v1633 = vpack.c.b16 %v1631, %v1630
          %v1637 = vsel %vm1558, %v1612, 0
          %1639 = vmatprep.subr.bf16.mxu0 0
          %1640 = vmatpush1.bf16.msra.mxu0 0
          %1641 = vmatprep.subr.bf16.mxu0 0
          %1642 = vmatpush1.bf16.msra.mxu0 0
          %1643 = vmatprep.subr.bf16.mxu0 0
          %1644 = vmatpush1.bf16.msra.mxu0 0
          %1645 = vmatprep.subr.bf16.mxu0 0
          %1646 = vmatpush1.bf16.msra.mxu0 0
          %1647 = vmatprep.subr.bf16.mxu0 0
          %1648 = vmatpush1.bf16.msra.mxu0 0
          %1649 = vmatprep.subr.bf16.mxu0 0
          %1650 = vmatpush1.bf16.msra.mxu0 0
          %1651 = vmatprep.subr.bf16.mxu0 0
          %1652 = vmatpush1.bf16.msra.mxu0 %v1633
          %1653 = vmatprep.subr.bf16.mxu0 0
          %1654 = vmatpush1.bf16.msra.mxu0 %v1632
          %1655 = vmatprep.subr.bf16.mxu0 0
          %1656 = vmatpush2.bf16.msra.mxu0 0
          %1657 = vmatprep.subr.bf16.mxu0 0
          %1658 = vmatpush2.bf16.msra.mxu0 0
          %1659 = vmatprep.subr.bf16.mxu0 0
          %1660 = vmatpush2.bf16.msra.mxu0 0
          %1661 = vmatprep.subr.bf16.mxu0 0
          %1662 = vmatpush2.bf16.msra.mxu0 0
          %1663 = vmatprep.subr.bf16.mxu0 0
          %1664 = vmatpush2.bf16.msra.mxu0 0
          %1665 = vmatprep.subr.bf16.mxu0 0
          %1666 = vmatpush2.bf16.msra.mxu0 0
          %1667 = vmatprep.subr.bf16.mxu0 0
          %1668 = vmatpush2.bf16.msra.mxu0 0
          %1669 = vmatprep.subr.bf16.mxu0 0
          %1670 = vmatpush2.bf16.msra.mxu0 0
          %1671 = vmatprep.mubr.bf16.mxu0 0
          %1672 = vmatmul.mubr.bf16.gmra.mxu0 %v1637
          %v1673 = vpop.f32.mrf.mxu0
          %v1674 = vadd.f32 %v1622, %v1673
          %v1675 = vpop.f32.mrf.mxu0
          %v1676 = vpop.f32.mrf.mxu0
          %v1677 = vpop.f32.mrf.mxu0
          %1678 = vdwg.mxu0
          %v1679 = vld [vmem:[%s675] sm:$0xff]
          %v1680 = vadd.f32 %v1679, %v1674
          %1681 = vst.msk [vmem:[%s644] sm:$0xff] %vm1558, %v1680
        $region96: #{tpu_custom_call.1} parent=83 // pred_fallthru
          _
        %s1682 = sand.u32 %s446, 1
        %s1683 = scalar_lea.sflag [#allocation7], %s1682
        %s1684 = sand.u32 %s446, 1
        %s1685 = smul.addr %s1684, 8
        %s1686 = scalar_lea.vmem [#allocation6], %s1685
        // Predicated region
        $region97: #{tpu_custom_call.1} parent=83 // pred_check
          %p1687 = pneg %p456
        $region98: #{tpu_custom_call.1} parent=83 // pred_check_branch
          %1689 = sbr.rel (%p1687) target = $region100
        $region99: #{tpu_custom_call.1} parent=83 // pred_region
          %s1691 = ssub.s32 128, 128
          %1692 = vsyncadd %s1683, %s1691
          %s1693 = smul.addr %s46, 128
          %s1694 = scalar_lea.hbm %s18, %s1693
          %s1696 = sshll.u32 %s1686, 4
          %s1697 = int_to_ptr.vmem [resolvable:$true] %s1696
          %1699 = dma.vmem_to_hbm [thread:$0]  %s1697, 128, %s1694, %s1683
        $region100: #{tpu_custom_call.1} parent=83 // pred_fallthru
          _
      $region84: #{tpu_custom_call.1} parent=5 // pred_fallthru
        _
      %p1700 = scmp.le.s32.totalorder 2, %s37
      // Predicated region
      $region101: #{tpu_custom_call.1} parent=5 // pred_check
        %p1701 = pneg %p1700
      $region102: #{tpu_custom_call.1} parent=5 // pred_check_branch
        %1703 = sbr.rel (%p1701) target = $region104
      $region103: #{tpu_custom_call.1} parent=5 // pred_region
        %s1704 = ssub.s32 %s37, 2
        // Predicated region
        $region105: #{tpu_custom_call.1} parent=103 // pred_check
          %p1705 = pneg %p462
        $region106: #{tpu_custom_call.1} parent=103 // pred_check_branch
          %1707 = sbr.rel (%p1705) target = $region108
        $region107: #{tpu_custom_call.1} parent=103 // pred_region
          %s1708 = sand.u32 %s447, 1
          %s1709 = scalar_lea.sflag [#allocation7], %s1708
          %s1710 = sand.u32 %s447, 1
          %s1711 = smul.addr %s1710, 8
          %s1712 = scalar_lea.vmem [#allocation6], %s1711
          %1713 = dma.done %s1709, 128
        $region108: #{tpu_custom_call.1} parent=103 // pred_fallthru
          _
      $region104: #{tpu_custom_call.1} parent=5 // pred_fallthru
        _
    $region6: #{tpu_custom_call.1} parent=1 // loop_footer
      %s41 = sadd.s32 1, %s37
    $region7: #{tpu_custom_call.1} parent=1 // loop_footer_branch
      %36 = sbr.rel target = $region3
    $region8: #{tpu_custom_call.1} parent=1 // loop_exit
      _
    %1714 = vsyncpa [#allocation7], 1
    %s1715 = scalar_lea.sflag [#allocation7], 1
    %1716 = vsyncpa %s1715, 1

</llo_original>
